<compile_context>
chip_gen: v7x
topology: tpu7x:2x2x1
jax: 0.10.0
libtpu: 0.0.40
codegen_flags: <defaults>
</compile_context>

<pallas_src>
import functools

import jax
import jax.numpy as jnp
from jax.experimental import pallas as pl
from jax.experimental.pallas import tpu as pltpu


def _round_up(x: int, m: int) -> int:
    return ((x + m - 1) // m) * m


_VMEM_LIMIT = 32 * 1024 * 1024  # safe on v5e / v6e / v7x


# --------------------------------------------------------------------------- #
# Pallas kernels
# --------------------------------------------------------------------------- #
def _mlp_kernel(dp, x_ref, w_ref, b_ref, dep_ref, ah_ref, rh_ref):
    """Fused NonLinear for mlp_arc_dep AND mlp_arc_head in one MXU pass.
       x: (TM, H_enc), w: (H_enc, 4*dp), b: (1, 4*dp)
       output lanes = [dep_arc | dep_rel | head_arc | head_rel], each dp wide,
       with the biaffine "ones" bias folded into lane `hidden` of every half.
       y = LeakyReLU(x @ W + b, negative_slope=0.1), split into three
       lane-aligned outputs (no wrapper-side slice copies)."""
    y = jnp.dot(x_ref[...], w_ref[...], preferred_element_type=jnp.float32) + b_ref[...]
    y = jnp.where(y > 0, y, 0.1 * y)                        # LeakyReLU(0.1)
    dep_ref[...] = y[:, : 2 * dp].astype(dep_ref.dtype)     # [arc_dep | rel_dep]
    ah_ref[...] = y[:, 2 * dp: 3 * dp].astype(ah_ref.dtype)  # arc_head
    rh_ref[...] = y[:, 3 * dp:].astype(rh_ref.dtype)         # rel_head


def _biaffine_kernel(n_labels, dp, d_ref, ah_ref, rh_ref, w_ref, arc_ref, rel_ref):
    """Per-batch fused arc + rel biaffine (bias already folded into lane `hidden`).
       d_ref : (1, S, 2*dp)            [arc_dep | rel_dep]
       ah_ref: (1, S, dp)              arc_head (all positions)
       rh_ref: (1, S, dp)              rel_head gathered at gold head positions
       w_ref : (2*dp, dp + L*dp)       block-diag [W_arc ; W_rel_flat]
       arc_ref: (1, S, S)   arc_ref[0, i, j] = d_arc_i^T W_arc h_arc_j
       rel_ref: (1, S, L)   rel_ref[0, i, o] = d_rel_i^T W_o h_rel_sel_i"""
    d = d_ref[0]                                             # (S, 2*dp)

    # One K=256 matmul produces both projected tensors: t = [ta | tr].
    t = jnp.dot(d, w_ref[...], preferred_element_type=jnp.float32)  # (S, dp + L*dp)
    ta = t[:, :dp]                                           # (S, dp)    arc proj
    tr = t[:, dp:]                                           # (S, L*dp)  rel proj

    # ---- arc scorer: (S,dp) x (S,dp)^T -> (S_dep, S_head)
    arc = jax.lax.dot_general(ta, ah_ref[0], (((1,), (1,)), ((), ())),
                              preferred_element_type=jnp.float32)
    arc_ref[0] = arc.astype(arc_ref.dtype)

    # ---- rel scorer fused with the gold-head gather: per-label lane-aligned
    # slice (free view), VPU multiply, XLU lane-reduce.
    rh = rh_ref[0]                                           # (S, dp)
    cols = [jnp.sum(tr[:, o * dp:(o + 1) * dp] * rh, axis=-1, keepdims=True)
            for o in range(n_labels)]                        # L x (S, 1)
    rel_ref[0] = jnp.concatenate(cols, axis=-1).astype(rel_ref.dtype)


# --------------------------------------------------------------------------- #
# Wrappers around pallas_call
# --------------------------------------------------------------------------- #
def mlp_fused(x2d, w_cat, b_cat, dp, *, tm=512):
    """x2d: (N, H_enc) -> dep (N, 2*dp), arc_head (N, dp), rel_head (N, dp)."""
    n, h_enc = x2d.shape
    out_dim = w_cat.shape[1]
    tm_eff = min(tm, _round_up(n, 8))
    n_pad = _round_up(n, tm_eff)
    if n_pad != n:
        x2d = jnp.pad(x2d, ((0, n_pad - n), (0, 0)))
    dep, ah, rh = pl.pallas_call(
        functools.partial(_mlp_kernel, dp),
        out_shape=(
            jax.ShapeDtypeStruct((n_pad, 2 * dp), jnp.float32),
            jax.ShapeDtypeStruct((n_pad, dp), jnp.float32),
            jax.ShapeDtypeStruct((n_pad, dp), jnp.float32),
        ),
        grid=(n_pad // tm_eff,),
        in_specs=[
            pl.BlockSpec((tm_eff, h_enc), lambda i: (i, 0)),
            pl.BlockSpec((h_enc, out_dim), lambda i: (0, 0)),   # weights stay resident
            pl.BlockSpec((1, out_dim), lambda i: (0, 0)),
        ],
        out_specs=(
            pl.BlockSpec((tm_eff, 2 * dp), lambda i: (i, 0)),
            pl.BlockSpec((tm_eff, dp), lambda i: (i, 0)),
            pl.BlockSpec((tm_eff, dp), lambda i: (i, 0)),
        ),
        compiler_params=pltpu.CompilerParams(
            dimension_semantics=("parallel",),
            vmem_limit_bytes=_VMEM_LIMIT),
    )(x2d, w_cat, b_cat)
    return dep[:n], ah[:n], rh[:n]


def biaffine_arc_rel(dep, arc_head, rel_head_sel, w_comb, n_labels):
    """dep: (B,S,2*dp), arc_head: (B,S,dp), rel_head_sel: (B,S,dp).
       Returns arc_logit (B,S,S) and rel_logit (B,S,L) directly (no transpose,
       no (B,S,S,L) intermediate)."""
    bsz, seq, two_dp = dep.shape
    dp = two_dp // 2
    out_shapes = (jax.ShapeDtypeStruct((bsz, seq, seq), jnp.float32),
                  jax.ShapeDtypeStruct((bsz, seq, n_labels), jnp.float32))
    return pl.pallas_call(
        functools.partial(_biaffine_kernel, n_labels, dp),
        out_shape=out_shapes,
        grid=(bsz,),
        in_specs=[
            pl.BlockSpec((1, seq, two_dp), lambda b: (b, 0, 0)),
            pl.BlockSpec((1, seq, dp), lambda b: (b, 0, 0)),
            pl.BlockSpec((1, seq, dp), lambda b: (b, 0, 0)),
            pl.BlockSpec((two_dp, dp + n_labels * dp), lambda b: (0, 0)),
        ],
        out_specs=(
            pl.BlockSpec((1, seq, seq), lambda b: (b, 0, 0)),
            pl.BlockSpec((1, seq, n_labels), lambda b: (b, 0, 0)),
        ),
        compiler_params=pltpu.CompilerParams(
            dimension_semantics=("parallel",),
            vmem_limit_bytes=_VMEM_LIMIT),
    )(dep, arc_head, rel_head_sel, w_comb)


# --------------------------------------------------------------------------- #
# DepParser.forward (training path; loss left as TODO)
# --------------------------------------------------------------------------- #
def dep_parser_forward(packed, feats, attention_mask, offsets, heads, rels, masks,
                       *, dp, num_labels):
    # ---- feat(): length, cls / char split -----------------------------------
    word_len = jnp.sum(attention_mask, axis=-1) - 2          # parity only (unused)
    del word_len
    cls_feat = feats[:, :1]                                  # (B, 1, H)
    char_feat = feats[:, 1:-1]                               # (B, T-2, H)

    # ---- word_feat = gather(char_feat, dim=1, index=offsets) ----------------
    bsz, n_words = offsets.shape
    h_enc = char_feat.shape[-1]
    idx = jnp.broadcast_to(offsets[:, :, None], (bsz, n_words, h_enc))
    word_feat = jnp.take_along_axis(char_feat, idx, axis=1)  # (B, L_words, H)
    word_cls_feat = jnp.concatenate([cls_feat, word_feat], axis=1)   # (B, S, H)
    seq = word_cls_feat.shape[1]

    # dropout == identity (eval mode)

    # ---- fused NonLinear MLPs (one Pallas matmul, three lane-aligned outputs)
    x2d = word_cls_feat.reshape(bsz * seq, h_enc)
    dep2d, ah2d, rh2d = mlp_fused(x2d, packed["w_cat"], packed["b_cat"], dp)
    dep = dep2d.reshape(bsz, seq, 2 * dp)                    # [arc_dep | rel_dep]
    arc_head = ah2d.reshape(bsz, seq, dp)
    rel_head = rh2d.reshape(bsz, seq, dp)

    # ---- gold-head gather fused into the rel biaffine -------------------------
    hidx = jnp.broadcast_to(heads[:, :, None], (bsz, seq, dp))
    rel_head_sel = jnp.take_along_axis(rel_head, hidx, axis=1)   # (B, S, dp)

    arc_logit, rel_logit = biaffine_arc_rel(
        dep, arc_head, rel_head_sel, packed["w_comb"], num_labels)

    # TODO(synk): arc_rel_loss is not defined in the reference snippet; returning logits only.
    del rels, masks
    return arc_logit, rel_logit


# --------------------------------------------------------------------------- #
# Parameters (raw PyTorch-layout params -> packed/padded kernel params)
# --------------------------------------------------------------------------- #
def make_raw_params(key, enc_hidden, hidden_size, num_labels):
    ks = jax.random.split(key, 6)
    mlp_out = 2 * hidden_size  # mlp_arc_size + mlp_rel_size
    scale = 0.02
    return {
        "w_dep": scale * jax.random.normal(ks[0], (enc_hidden, mlp_out), jnp.float32),
        "b_dep": scale * jax.random.normal(ks[1], (mlp_out,), jnp.float32),
        "w_head": scale * jax.random.normal(ks[2], (enc_hidden, mlp_out), jnp.float32),
        "b_head": scale * jax.random.normal(ks[3], (mlp_out,), jnp.float32),
        # TODO(synk): reference Biaffine assumed to append bias to both inputs
        # ((n_out, D+1, D+1)); verify bias_x/bias_y against the real Biaffine impl.
        "w_arc": scale * jax.random.normal(ks[4], (1, hidden_size + 1, hidden_size + 1), jnp.float32),
        "w_rel": scale * jax.random.normal(ks[5], (num_labels, hidden_size + 1, hidden_size + 1), jnp.float32),
    }


def pack_params(raw, hidden_size, num_labels, dp=128):
    """Pad every feature half to `dp` lanes, fold the biaffine bias into lane
       `hidden_size` (weight col zero, bias 1 -> stays 1 through LeakyReLU),
       fuse dep/head MLP weights, and stack arc + flattened rel biaffine
       weights block-diagonally into one (2*dp, dp + L*dp) matrix."""
    assert hidden_size < dp, "bias lane must fit inside the padded width"
    enc_h = raw["w_dep"].shape[0]
    h = hidden_size

    w_cat = jnp.zeros((enc_h, 4 * dp), jnp.float32)
    b_cat = jnp.zeros((1, 4 * dp), jnp.float32)
    halves = [
        (raw["w_dep"][:, :h], raw["b_dep"][:h]),    # dep  arc
        (raw["w_dep"][:, h:], raw["b_dep"][h:]),    # dep  rel
        (raw["w_head"][:, :h], raw["b_head"][:h]),  # head arc
        (raw["w_head"][:, h:], raw["b_head"][h:]),  # head rel
    ]
    for q, (w, b) in enumerate(halves):
        w_cat = w_cat.at[:, q * dp:q * dp + h].set(w)
        b_cat = b_cat.at[0, q * dp:q * dp + h].set(b)
        b_cat = b_cat.at[0, q * dp + h].set(1.0)    # folded biaffine bias lane

    w_arc_p = jnp.zeros((dp, dp), jnp.float32).at[:h + 1, :h + 1].set(raw["w_arc"][0])
    w_rel_p = jnp.zeros((num_labels, dp, dp), jnp.float32).at[:, :h + 1, :h + 1].set(raw["w_rel"])
    w_rel_flat = jnp.transpose(w_rel_p, (1, 0, 2)).reshape(dp, num_labels * dp)

    w_comb = jnp.zeros((2 * dp, dp + num_labels * dp), jnp.float32)
    w_comb = w_comb.at[:dp, :dp].set(w_arc_p)
    w_comb = w_comb.at[dp:, dp:].set(w_rel_flat)

    return {"w_cat": w_cat, "b_cat": b_cat, "w_comb": w_comb}


# --------------------------------------------------------------------------- #
# Example run
# --------------------------------------------------------------------------- #
if __name__ == "__main__":
    B = 2            # batch
    T = 12           # encoder tokens (CLS + 10 chars + SEP)
    L_WORDS = 8      # words
    S = L_WORDS + 1  # CLS + words
    ENC_H = 128      # encoder hidden size (small, lane-aligned)
    HIDDEN = 100     # cfg.hidden_size (multiple of 100 -> arc_num = rel_num = 1)
    NUM_LABELS = 8   # cfg.num_labels
    DP = 128         # padded per-half feature width (MXU/lane aligned)

    root = jax.random.PRNGKey(0)
    k_par, k_feat, k_off, k_head, k_rel = jax.random.split(root, 5)
    raw_params = make_raw_params(k_par, ENC_H, HIDDEN, NUM_LABELS)
    packed = pack_params(raw_params, HIDDEN, NUM_LABELS, DP)

    # TODO(synk): AutoModel encoder has no Pallas equivalent here; its output is
    # replaced by deterministic synthetic hidden states of the same shape.
    feats = jax.random.normal(k_feat, (B, T, ENC_H), jnp.float32)
    attention_mask = jnp.ones((B, T), jnp.int32)
    offsets = jax.random.randint(k_off, (B, L_WORDS), 0, T - 2, jnp.int32)
    heads = jax.random.randint(k_head, (B, S), 0, S, jnp.int32)
    rels = jax.random.randint(k_rel, (B, S), 0, NUM_LABELS, jnp.int32)
    masks = jnp.ones((B, S), jnp.float32)

    fwd = jax.jit(functools.partial(dep_parser_forward, dp=DP, num_labels=NUM_LABELS))
    arc_logit, rel_logit = fwd(packed, feats, attention_mask, offsets, heads, rels, masks)
    jax.block_until_ready((arc_logit, rel_logit))

    assert arc_logit.shape == (B, S, S), arc_logit.shape
    assert rel_logit.shape == (B, S, NUM_LABELS), rel_logit.shape
    print("KERNEL_OK")
</pallas_src>

<mosaic_0001>
module attributes {stable_mosaic.version = 11 : i64} {
  func.func private @main(%arg0: i32) attributes {dimension_semantics = [#tpu.dimension_semantics<core_parallel>], iteration_bounds = array<i64: 2>, tpu.core_type = #tpu.core_type<sc_scalar_subcore>, window_params = []} {
    return
  }
}

module attributes {stable_mosaic.version = 11 : i64} {
  func.func private @main(%arg0: i32) attributes {dimension_semantics = [#tpu.dimension_semantics<core_parallel>], iteration_bounds = array<i64: 2>, tpu.core_type = #tpu.core_type<sc_scalar_subcore>, window_params = []} {
    return
  }
}

module attributes {stable_mosaic.version = 11 : i64} {
  func.func @_mlp_kernel(%arg0: i32, %arg1: memref<24x128xf32, #tpu.memory_space<vmem>>, %arg2: memref<128x512xf32, #tpu.memory_space<vmem>>, %arg3: memref<1x512xf32, #tpu.memory_space<vmem>>, %arg4: memref<24x256xf32, #tpu.memory_space<vmem>>, %arg5: memref<24x128xf32, #tpu.memory_space<vmem>>, %arg6: memref<24x128xf32, #tpu.memory_space<vmem>>) attributes {dimension_semantics = [#tpu.dimension_semantics<parallel>], iteration_bounds = array<i64: 1>, scalar_prefetch = 0 : i64, scratch_operands = 0 : i64, tpu.core_type = #tpu.core_type<tc>, window_params = [{transform_indices = @transform_0, window_bounds = array<i64: 24, 128>}, {pipeline_mode = #tpu.pipeline_mode<synchronous>, transform_indices = @transform_1, window_bounds = array<i64: 128, 512>}, {pipeline_mode = #tpu.pipeline_mode<synchronous>, transform_indices = @transform_2, window_bounds = array<i64: 1, 512>}, {transform_indices = @transform_3, window_bounds = array<i64: 24, 256>}, {transform_indices = @transform_4, window_bounds = array<i64: 24, 128>}, {transform_indices = @transform_5, window_bounds = array<i64: 24, 128>}]} {
    %c0 = arith.constant 0 : index
    %c0_0 = arith.constant 0 : index
    %0 = vector.load %arg1[%c0, %c0_0] : memref<24x128xf32, #tpu.memory_space<vmem>>, vector<24x128xf32>
    %c0_1 = arith.constant 0 : index
    %c0_2 = arith.constant 0 : index
    %1 = vector.load %arg2[%c0_1, %c0_2] : memref<128x512xf32, #tpu.memory_space<vmem>>, vector<128x512xf32>
    %cst = arith.constant dense<0.000000e+00> : vector<24x512xf32>
    %2 = tpu.matmul %0, %1, %cst {dimension_numbers = #tpu.dot_dimension_numbers<[1], [0], [0], [1], [0, 0, 1, 1], [], []>} : vector<24x128xf32>, vector<128x512xf32>, vector<24x512xf32> -> vector<24x512xf32>
    %c0_3 = arith.constant 0 : index
    %c0_4 = arith.constant 0 : index
    %3 = vector.load %arg3[%c0_3, %c0_4] : memref<1x512xf32, #tpu.memory_space<vmem>>, vector<1x512xf32>
    %4 = vector.broadcast %3 : vector<1x512xf32> to vector<24x512xf32>
    %5 = arith.addf %2, %4 : vector<24x512xf32>
    %cst_5 = arith.constant 0.000000e+00 : f32
    %6 = vector.broadcast %cst_5 : f32 to vector<24x512xf32>
    %7 = arith.cmpf ogt, %5, %6 : vector<24x512xf32>
    %cst_6 = arith.constant 1.000000e-01 : f32
    %8 = vector.broadcast %cst_6 : f32 to vector<24x512xf32>
    %9 = arith.mulf %8, %5 : vector<24x512xf32>
    %10 = arith.select %7, %5, %9 : vector<24x512xi1>, vector<24x512xf32>
    %11 = vector.extract_strided_slice %10 {offsets = [0, 0], sizes = [24, 256], strides = [1, 1]} : vector<24x512xf32> to vector<24x256xf32>
    %c0_7 = arith.constant 0 : index
    %c0_8 = arith.constant 0 : index
    %12 = vector.load %arg4[%c0_7, %c0_8] : memref<24x256xf32, #tpu.memory_space<vmem>>, vector<24x256xf32>
    tpu.vector_store %arg4[%c0_7, %c0_8], %11 {strides = array<i32>} : memref<24x256xf32, #tpu.memory_space<vmem>>, vector<24x256xf32>,
    %13 = vector.extract_strided_slice %10 {offsets = [0, 256], sizes = [24, 128], strides = [1, 1]} : vector<24x512xf32> to vector<24x128xf32>
    %c0_9 = arith.constant 0 : index
    %c0_10 = arith.constant 0 : index
    %14 = vector.load %arg5[%c0_9, %c0_10] : memref<24x128xf32, #tpu.memory_space<vmem>>, vector<24x128xf32>
    tpu.vector_store %arg5[%c0_9, %c0_10], %13 {strides = array<i32>} : memref<24x128xf32, #tpu.memory_space<vmem>>, vector<24x128xf32>,
    %15 = vector.extract_strided_slice %10 {offsets = [0, 384], sizes = [24, 128], strides = [1, 1]} : vector<24x512xf32> to vector<24x128xf32>
    %c0_11 = arith.constant 0 : index
    %c0_12 = arith.constant 0 : index
    %16 = vector.load %arg6[%c0_11, %c0_12] : memref<24x128xf32, #tpu.memory_space<vmem>>, vector<24x128xf32>
    tpu.vector_store %arg6[%c0_11, %c0_12], %15 {strides = array<i32>} : memref<24x128xf32, #tpu.memory_space<vmem>>, vector<24x128xf32>,
    return
  }
  func.func @transform_0(%arg0: i32) -> (i32, i32) {
    %c0_i32 = arith.constant 0 : i32
    %c0_i32_0 = arith.constant 0 : i32
    return %arg0, %c0_i32 : i32, i32
  }
  func.func @transform_1(%arg0: i32) -> (i32, i32) {
    %c0_i32 = arith.constant 0 : i32
    %c0_i32_0 = arith.constant 0 : i32
    %c0_i32_1 = arith.constant 0 : i32
    return %c0_i32, %c0_i32_0 : i32, i32
  }
  func.func @transform_2(%arg0: i32) -> (i32, i32) {
    %c0_i32 = arith.constant 0 : i32
    %c0_i32_0 = arith.constant 0 : i32
    %c0_i32_1 = arith.constant 0 : i32
    return %c0_i32, %c0_i32_0 : i32, i32
  }
  func.func @transform_3(%arg0: i32) -> (i32, i32) {
    %c0_i32 = arith.constant 0 : i32
    %c0_i32_0 = arith.constant 0 : i32
    return %arg0, %c0_i32 : i32, i32
  }
  func.func @transform_4(%arg0: i32) -> (i32, i32) {
    %c0_i32 = arith.constant 0 : i32
    %c0_i32_0 = arith.constant 0 : i32
    return %arg0, %c0_i32 : i32, i32
  }
  func.func @transform_5(%arg0: i32) -> (i32, i32) {
    %c0_i32 = arith.constant 0 : i32
    %c0_i32_0 = arith.constant 0 : i32
    return %arg0, %c0_i32 : i32, i32
  }
}

module attributes {stable_mosaic.version = 11 : i64} {
  func.func @_biaffine_kernel(%arg0: i32, %arg1: memref<1x9x256xf32, #tpu.memory_space<vmem>>, %arg2: memref<1x9x128xf32, #tpu.memory_space<vmem>>, %arg3: memref<1x9x128xf32, #tpu.memory_space<vmem>>, %arg4: memref<256x1152xf32, #tpu.memory_space<vmem>>, %arg5: memref<1x9x9xf32, #tpu.memory_space<vmem>>, %arg6: memref<1x9x8xf32, #tpu.memory_space<vmem>>) attributes {dimension_semantics = [#tpu.dimension_semantics<parallel>], iteration_bounds = array<i64: 2>, scalar_prefetch = 0 : i64, scratch_operands = 0 : i64, tpu.core_type = #tpu.core_type<tc>, window_params = [{transform_indices = @transform_0, window_bounds = array<i64: 1, 9, 256>}, {transform_indices = @transform_1, window_bounds = array<i64: 1, 9, 128>}, {transform_indices = @transform_2, window_bounds = array<i64: 1, 9, 128>}, {pipeline_mode = #tpu.pipeline_mode<synchronous>, transform_indices = @transform_3, window_bounds = array<i64: 256, 1152>}, {transform_indices = @transform_4, window_bounds = array<i64: 1, 9, 9>}, {transform_indices = @transform_5, window_bounds = array<i64: 1, 9, 8>}]} {
    %c0 = arith.constant 0 : index
    %c0_0 = arith.constant 0 : index
    %c0_1 = arith.constant 0 : index
    %0 = vector.load %arg1[%c0, %c0_0, %c0_1] : memref<1x9x256xf32, #tpu.memory_space<vmem>>, vector<1x9x256xf32>
    %1 = vector.shape_cast %0 : vector<1x9x256xf32> to vector<9x256xf32>
    %c0_2 = arith.constant 0 : index
    %c0_3 = arith.constant 0 : index
    %2 = vector.load %arg4[%c0_2, %c0_3] : memref<256x1152xf32, #tpu.memory_space<vmem>>, vector<256x1152xf32>
    %cst = arith.constant dense<0.000000e+00> : vector<9x1152xf32>
    %3 = tpu.matmul %1, %2, %cst {dimension_numbers = #tpu.dot_dimension_numbers<[1], [0], [0], [1], [0, 0, 1, 1], [], []>} : vector<9x256xf32>, vector<256x1152xf32>, vector<9x1152xf32> -> vector<9x1152xf32>
    %4 = vector.extract_strided_slice %3 {offsets = [0, 0], sizes = [9, 128], strides = [1, 1]} : vector<9x1152xf32> to vector<9x128xf32>
    %5 = vector.extract_strided_slice %3 {offsets = [0, 128], sizes = [9, 1024], strides = [1, 1]} : vector<9x1152xf32> to vector<9x1024xf32>
    %c0_4 = arith.constant 0 : index
    %c0_5 = arith.constant 0 : index
    %c0_6 = arith.constant 0 : index
    %6 = vector.load %arg2[%c0_4, %c0_5, %c0_6] : memref<1x9x128xf32, #tpu.memory_space<vmem>>, vector<1x9x128xf32>
    %7 = vector.shape_cast %6 : vector<1x9x128xf32> to vector<9x128xf32>
    %cst_7 = arith.constant dense<0.000000e+00> : vector<9x9xf32>
    %8 = tpu.matmul %4, %7, %cst_7 {dimension_numbers = #tpu.dot_dimension_numbers<[1], [1], [0], [0], [0, 0, 1, 0], [], []>} : vector<9x128xf32>, vector<9x128xf32>, vector<9x9xf32> -> vector<9x9xf32>
    %c0_8 = arith.constant 0 : index
    %c0_9 = arith.constant 0 : index
    %c0_10 = arith.constant 0 : index
    %9 = vector.load %arg5[%c0_8, %c0_9, %c0_10] : memref<1x9x9xf32, #tpu.memory_space<vmem>>, vector<1x9x9xf32>
    %10 = vector.shape_cast %9 : vector<1x9x9xf32> to vector<9x9xf32>
    %11 = vector.shape_cast %8 : vector<9x9xf32> to vector<1x9x9xf32>
    tpu.vector_store %arg5[%c0_8, %c0_9, %c0_10], %11 {strides = array<i32>} : memref<1x9x9xf32, #tpu.memory_space<vmem>>, vector<1x9x9xf32>,
    %c0_11 = arith.constant 0 : index
    %c0_12 = arith.constant 0 : index
    %c0_13 = arith.constant 0 : index
    %12 = vector.load %arg3[%c0_11, %c0_12, %c0_13] : memref<1x9x128xf32, #tpu.memory_space<vmem>>, vector<1x9x128xf32>
    %13 = vector.shape_cast %12 : vector<1x9x128xf32> to vector<9x128xf32>
    %14 = vector.extract_strided_slice %5 {offsets = [0, 0], sizes = [9, 128], strides = [1, 1]} : vector<9x1024xf32> to vector<9x128xf32>
    %15 = arith.mulf %14, %13 : vector<9x128xf32>
    %cst_14 = arith.constant dense<0.000000e+00> : vector<9xf32>
    %16 = vector.multi_reduction <add>, %15, %cst_14 [1] : vector<9x128xf32> to vector<9xf32>
    %17 = vector.shape_cast %16 : vector<9xf32> to vector<9x1xf32>
    %18 = vector.extract_strided_slice %5 {offsets = [0, 128], sizes = [9, 128], strides = [1, 1]} : vector<9x1024xf32> to vector<9x128xf32>
    %19 = arith.mulf %18, %13 : vector<9x128xf32>
    %cst_15 = arith.constant dense<0.000000e+00> : vector<9xf32>
    %20 = vector.multi_reduction <add>, %19, %cst_15 [1] : vector<9x128xf32> to vector<9xf32>
    %21 = vector.shape_cast %20 : vector<9xf32> to vector<9x1xf32>
    %22 = vector.extract_strided_slice %5 {offsets = [0, 256], sizes = [9, 128], strides = [1, 1]} : vector<9x1024xf32> to vector<9x128xf32>
    %23 = arith.mulf %22, %13 : vector<9x128xf32>
    %cst_16 = arith.constant dense<0.000000e+00> : vector<9xf32>
    %24 = vector.multi_reduction <add>, %23, %cst_16 [1] : vector<9x128xf32> to vector<9xf32>
    %25 = vector.shape_cast %24 : vector<9xf32> to vector<9x1xf32>
    %26 = vector.extract_strided_slice %5 {offsets = [0, 384], sizes = [9, 128], strides = [1, 1]} : vector<9x1024xf32> to vector<9x128xf32>
    %27 = arith.mulf %26, %13 : vector<9x128xf32>
    %cst_17 = arith.constant dense<0.000000e+00> : vector<9xf32>
    %28 = vector.multi_reduction <add>, %27, %cst_17 [1] : vector<9x128xf32> to vector<9xf32>
    %29 = vector.shape_cast %28 : vector<9xf32> to vector<9x1xf32>
    %30 = vector.extract_strided_slice %5 {offsets = [0, 512], sizes = [9, 128], strides = [1, 1]} : vector<9x1024xf32> to vector<9x128xf32>
    %31 = arith.mulf %30, %13 : vector<9x128xf32>
    %cst_18 = arith.constant dense<0.000000e+00> : vector<9xf32>
    %32 = vector.multi_reduction <add>, %31, %cst_18 [1] : vector<9x128xf32> to vector<9xf32>
    %33 = vector.shape_cast %32 : vector<9xf32> to vector<9x1xf32>
    %34 = vector.extract_strided_slice %5 {offsets = [0, 640], sizes = [9, 128], strides = [1, 1]} : vector<9x1024xf32> to vector<9x128xf32>
    %35 = arith.mulf %34, %13 : vector<9x128xf32>
    %cst_19 = arith.constant dense<0.000000e+00> : vector<9xf32>
    %36 = vector.multi_reduction <add>, %35, %cst_19 [1] : vector<9x128xf32> to vector<9xf32>
    %37 = vector.shape_cast %36 : vector<9xf32> to vector<9x1xf32>
    %38 = vector.extract_strided_slice %5 {offsets = [0, 768], sizes = [9, 128], strides = [1, 1]} : vector<9x1024xf32> to vector<9x128xf32>
    %39 = arith.mulf %38, %13 : vector<9x128xf32>
    %cst_20 = arith.constant dense<0.000000e+00> : vector<9xf32>
    %40 = vector.multi_reduction <add>, %39, %cst_20 [1] : vector<9x128xf32> to vector<9xf32>
    %41 = vector.shape_cast %40 : vector<9xf32> to vector<9x1xf32>
    %42 = vector.extract_strided_slice %5 {offsets = [0, 896], sizes = [9, 128], strides = [1, 1]} : vector<9x1024xf32> to vector<9x128xf32>
    %43 = arith.mulf %42, %13 : vector<9x128xf32>
    %cst_21 = arith.constant dense<0.000000e+00> : vector<9xf32>
    %44 = vector.multi_reduction <add>, %43, %cst_21 [1] : vector<9x128xf32> to vector<9xf32>
    %45 = vector.shape_cast %44 : vector<9xf32> to vector<9x1xf32>
    %46 = tpu.concatenate %17, %21, %25, %29, %33, %37, %41, %45 in 1 : vector<9x1xf32>, vector<9x1xf32>, vector<9x1xf32>, vector<9x1xf32>, vector<9x1xf32>, vector<9x1xf32>, vector<9x1xf32>, vector<9x1xf32> -> vector<9x8xf32>
    %c0_22 = arith.constant 0 : index
    %c0_23 = arith.constant 0 : index
    %c0_24 = arith.constant 0 : index
    %47 = vector.load %arg6[%c0_22, %c0_23, %c0_24] : memref<1x9x8xf32, #tpu.memory_space<vmem>>, vector<1x9x8xf32>
    %48 = vector.shape_cast %47 : vector<1x9x8xf32> to vector<9x8xf32>
    %49 = vector.shape_cast %46 : vector<9x8xf32> to vector<1x9x8xf32>
    tpu.vector_store %arg6[%c0_22, %c0_23, %c0_24], %49 {strides = array<i32>} : memref<1x9x8xf32, #tpu.memory_space<vmem>>, vector<1x9x8xf32>,
    return
  }
  func.func @transform_0(%arg0: i32) -> (i32, i32, i32) {
    %c0_i32 = arith.constant 0 : i32
    %c0_i32_0 = arith.constant 0 : i32
    %c0_i32_1 = arith.constant 0 : i32
    return %arg0, %c0_i32, %c0_i32_0 : i32, i32, i32
  }
  func.func @transform_1(%arg0: i32) -> (i32, i32, i32) {
    %c0_i32 = arith.constant 0 : i32
    %c0_i32_0 = arith.constant 0 : i32
    %c0_i32_1 = arith.constant 0 : i32
    return %arg0, %c0_i32, %c0_i32_0 : i32, i32, i32
  }
  func.func @transform_2(%arg0: i32) -> (i32, i32, i32) {
    %c0_i32 = arith.constant 0 : i32
    %c0_i32_0 = arith.constant 0 : i32
    %c0_i32_1 = arith.constant 0 : i32
    return %arg0, %c0_i32, %c0_i32_0 : i32, i32, i32
  }
  func.func @transform_3(%arg0: i32) -> (i32, i32) {
    %c0_i32 = arith.constant 0 : i32
    %c0_i32_0 = arith.constant 0 : i32
    %c0_i32_1 = arith.constant 0 : i32
    return %c0_i32, %c0_i32_0 : i32, i32
  }
  func.func @transform_4(%arg0: i32) -> (i32, i32, i32) {
    %c0_i32 = arith.constant 0 : i32
    %c0_i32_0 = arith.constant 0 : i32
    %c0_i32_1 = arith.constant 0 : i32
    return %arg0, %c0_i32, %c0_i32_0 : i32, i32, i32
  }
  func.func @transform_5(%arg0: i32) -> (i32, i32, i32) {
    %c0_i32 = arith.constant 0 : i32
    %c0_i32_0 = arith.constant 0 : i32
    %c0_i32_1 = arith.constant 0 : i32
    return %arg0, %c0_i32, %c0_i32_0 : i32, i32, i32
  }
}

</mosaic_0001>

<llo_original>
// kernel: dep_parser_forward.2
$region0: #{dep_parser_forward.2}
  #allocation0 [shape = 'u32[]', space=smem, size = 0x4, offset = 0x4, fixed_abs, tag = 'smem constant byte address 0x4 - core index']
  #allocation1 [shape = 'u32[144,128]{1,0:T(1,128)}', space=vmem, size = 0x12000, scoped, tag = 'internal scratch']
  %s0 = inlined_call_operand.vmem [shape: f32[24,128], index: 0, kind: input, shape index: {}]
  %s1 = inlined_call_operand.vmem [shape: f32[128,512], index: 1, kind: input, shape index: {}]
  %s2 = inlined_call_operand.vmem [shape: f32[1,512], index: 2, kind: input, shape index: {}]
  %s3 = inlined_call_operand.vmem [shape: f32[24,256], index: 3, kind: output, shape index: {0}]
  %s4 = inlined_call_operand.vmem [shape: f32[24,128], index: 4, kind: output, shape index: {1}]
  %s5 = inlined_call_operand.vmem [shape: f32[24,128], index: 5, kind: output, shape index: {2}]
  %6 = xla_tuple %s3, %s4, %s5
  %s7 = sld [smem:[#allocation0]]
  $region38: #{dep_parser_forward.2} parent=0
    _
  %s9 = ssub.s32 1, %s7
  %s10 = scalar_select 0, %s9, %s7
  // Predicated region
  $region2: #{dep_parser_forward.2} parent=0 // pred_check
    _
  $region3: #{dep_parser_forward.2} parent=0 // pred_check_branch
    %12 = sbr.rel (0) target = $region5
  $region4: #{dep_parser_forward.2} parent=0 // pred_region
    _
  $region5: #{dep_parser_forward.2} parent=0 // pred_fallthru
    _
  // Predicated region
  $region6: #{dep_parser_forward.2} parent=0 // pred_check
    _
  $region7: #{dep_parser_forward.2} parent=0 // pred_check_branch
    %14 = sbr.rel (0) target = $region9
  $region8: #{dep_parser_forward.2} parent=0 // pred_region
    _
  $region9: #{dep_parser_forward.2} parent=0 // pred_fallthru
    _
  // Predicated region
  $region10: #{dep_parser_forward.2} parent=0 // pred_check
    _
  $region11: #{dep_parser_forward.2} parent=0 // pred_check_branch
    %16 = sbr.rel (0) target = $region13
  $region12: #{dep_parser_forward.2} parent=0 // pred_region
    _
  $region13: #{dep_parser_forward.2} parent=0 // pred_fallthru
    _
  %v17 = vld [vmem:[%s0] sm:$0xff]
  %v18 = vld [vmem:[%s0 + $0x8] sm:$0xff]
  %v19 = vld [vmem:[%s0 + $0x10] sm:$0xff]
  %v20 = vld [vmem:[%s1] sm:$0xff]
  %v21 = vld [vmem:[%s1 + $0x8] sm:$0xff]
  %v22 = vld [vmem:[%s1 + $0x10] sm:$0xff]
  %v23 = vld [vmem:[%s1 + $0x18] sm:$0xff]
  %v24 = vld [vmem:[%s1 + $0x20] sm:$0xff]
  %v25 = vld [vmem:[%s1 + $0x28] sm:$0xff]
  %v26 = vld [vmem:[%s1 + $0x30] sm:$0xff]
  %v27 = vld [vmem:[%s1 + $0x38] sm:$0xff]
  %v28 = vld [vmem:[%s1 + $0x40] sm:$0xff]
  %v29 = vld [vmem:[%s1 + $0x48] sm:$0xff]
  %v30 = vld [vmem:[%s1 + $0x50] sm:$0xff]
  %v31 = vld [vmem:[%s1 + $0x58] sm:$0xff]
  %v32 = vld [vmem:[%s1 + $0x60] sm:$0xff]
  %v33 = vld [vmem:[%s1 + $0x68] sm:$0xff]
  %v34 = vld [vmem:[%s1 + $0x70] sm:$0xff]
  %v35 = vld [vmem:[%s1 + $0x78] sm:$0xff]
  %v36 = vld [vmem:[%s1 + $0x80] sm:$0xff]
  %v37 = vld [vmem:[%s1 + $0x88] sm:$0xff]
  %v38 = vld [vmem:[%s1 + $0x90] sm:$0xff]
  %v39 = vld [vmem:[%s1 + $0x98] sm:$0xff]
  %v40 = vld [vmem:[%s1 + $0xa0] sm:$0xff]
  %v41 = vld [vmem:[%s1 + $0xa8] sm:$0xff]
  %v42 = vld [vmem:[%s1 + $0xb0] sm:$0xff]
  %v43 = vld [vmem:[%s1 + $0xb8] sm:$0xff]
  %v44 = vld [vmem:[%s1 + $0xc0] sm:$0xff]
  %v45 = vld [vmem:[%s1 + $0xc8] sm:$0xff]
  %v46 = vld [vmem:[%s1 + $0xd0] sm:$0xff]
  %v47 = vld [vmem:[%s1 + $0xd8] sm:$0xff]
  %v48 = vld [vmem:[%s1 + $0xe0] sm:$0xff]
  %v49 = vld [vmem:[%s1 + $0xe8] sm:$0xff]
  %v50 = vld [vmem:[%s1 + $0xf0] sm:$0xff]
  %v51 = vld [vmem:[%s1 + $0xf8] sm:$0xff]
  %v52 = vld [vmem:[%s1 + $0x100] sm:$0xff]
  %v53 = vld [vmem:[%s1 + $0x108] sm:$0xff]
  %v54 = vld [vmem:[%s1 + $0x110] sm:$0xff]
  %v55 = vld [vmem:[%s1 + $0x118] sm:$0xff]
  %v56 = vld [vmem:[%s1 + $0x120] sm:$0xff]
  %v57 = vld [vmem:[%s1 + $0x128] sm:$0xff]
  %v58 = vld [vmem:[%s1 + $0x130] sm:$0xff]
  %v59 = vld [vmem:[%s1 + $0x138] sm:$0xff]
  %v60 = vld [vmem:[%s1 + $0x140] sm:$0xff]
  %v61 = vld [vmem:[%s1 + $0x148] sm:$0xff]
  %v62 = vld [vmem:[%s1 + $0x150] sm:$0xff]
  %v63 = vld [vmem:[%s1 + $0x158] sm:$0xff]
  %v64 = vld [vmem:[%s1 + $0x160] sm:$0xff]
  %v65 = vld [vmem:[%s1 + $0x168] sm:$0xff]
  %v66 = vld [vmem:[%s1 + $0x170] sm:$0xff]
  %v67 = vld [vmem:[%s1 + $0x178] sm:$0xff]
  %v68 = vld [vmem:[%s1 + $0x180] sm:$0xff]
  %v69 = vld [vmem:[%s1 + $0x188] sm:$0xff]
  %v70 = vld [vmem:[%s1 + $0x190] sm:$0xff]
  %v71 = vld [vmem:[%s1 + $0x198] sm:$0xff]
  %v72 = vld [vmem:[%s1 + $0x1a0] sm:$0xff]
  %v73 = vld [vmem:[%s1 + $0x1a8] sm:$0xff]
  %v74 = vld [vmem:[%s1 + $0x1b0] sm:$0xff]
  %v75 = vld [vmem:[%s1 + $0x1b8] sm:$0xff]
  %v76 = vld [vmem:[%s1 + $0x1c0] sm:$0xff]
  %v77 = vld [vmem:[%s1 + $0x1c8] sm:$0xff]
  %v78 = vld [vmem:[%s1 + $0x1d0] sm:$0xff]
  %v79 = vld [vmem:[%s1 + $0x1d8] sm:$0xff]
  %v80 = vld [vmem:[%s1 + $0x1e0] sm:$0xff]
  %v81 = vld [vmem:[%s1 + $0x1e8] sm:$0xff]
  %v82 = vld [vmem:[%s1 + $0x1f0] sm:$0xff]
  %v83 = vld [vmem:[%s1 + $0x1f8] sm:$0xff]
  %v84 = vld [vmem:[%s2] sm:$0xf]
  %v86 = vlaneseq
  %v87 = vshrl.u32 %v86, 7
  %v88 = vsub.s32 0, %v87
  %v89 = vrot.slane %v84, %v88
  %v90 = vlaneseq
  %v91 = vshrl.u32 %v90, 7
  %v92 = vsub.s32 1, %v91
  %v93 = vrot.slane %v84, %v92
  %v94 = vlaneseq
  %v95 = vshrl.u32 %v94, 7
  %v96 = vsub.s32 2, %v95
  %v97 = vrot.slane %v84, %v96
  %v98 = vlaneseq
  %v99 = vshrl.u32 %v98, 7
  %v100 = vsub.s32 3, %v99
  %v101 = vrot.slane %v84, %v100
  %106 = vmatprep.subr.mxu0 %v21
  %107 = vmatpush1.msra.mxu0 %v20
  %108 = vmatprep.subr.mxu0 %v25
  %109 = vmatpush1.msra.mxu0 %v24
  %110 = vmatprep.subr.mxu0 %v29
  %111 = vmatpush1.msra.mxu0 %v28
  %112 = vmatprep.subr.mxu0 %v33
  %113 = vmatpush1.msra.mxu0 %v32
  %114 = vmatprep.subr.mxu0 %v37
  %115 = vmatpush1.msra.mxu0 %v36
  %116 = vmatprep.subr.mxu0 %v41
  %117 = vmatpush1.msra.mxu0 %v40
  %118 = vmatprep.subr.mxu0 %v45
  %119 = vmatpush1.msra.mxu0 %v44
  %120 = vmatprep.subr.mxu0 %v49
  %121 = vmatpush1.msra.mxu0 %v48
  %122 = vmatprep.subr.mxu0 %v53
  %123 = vmatpush1.msra.mxu0 %v52
  %124 = vmatprep.subr.mxu0 %v57
  %125 = vmatpush1.msra.mxu0 %v56
  %126 = vmatprep.subr.mxu0 %v61
  %127 = vmatpush1.msra.mxu0 %v60
  %128 = vmatprep.subr.mxu0 %v65
  %129 = vmatpush1.msra.mxu0 %v64
  %130 = vmatprep.subr.mxu0 %v69
  %131 = vmatpush1.msra.mxu0 %v68
  %132 = vmatprep.subr.mxu0 %v73
  %133 = vmatpush1.msra.mxu0 %v72
  %134 = vmatprep.subr.mxu0 %v77
  %135 = vmatpush1.msra.mxu0 %v76
  %136 = vmatprep.subr.mxu0 %v81
  %137 = vmatpush1.msra.mxu0 %v80
  %138 = vmatprep.subr.mxu0 0.0
  %139 = vmatpush1.msra.mxu0 0.0
  %140 = vmatprep.subr.mxu0 0.0
  %141 = vmatpush1.msra.mxu0 0.0
  %142 = vmatprep.subr.mxu0 0.0
  %143 = vmatpush1.msra.mxu0 0.0
  %144 = vmatprep.subr.mxu0 0.0
  %145 = vmatpush1.msra.mxu0 0.0
  %146 = vmatprep.subr.mxu0 0.0
  %147 = vmatpush1.msra.mxu0 0.0
  %148 = vmatprep.subr.mxu0 0.0
  %149 = vmatpush1.msra.mxu0 0.0
  %150 = vmatprep.subr.mxu0 0.0
  %151 = vmatpush1.msra.mxu0 0.0
  %152 = vmatprep.subr.mxu0 0.0
  %153 = vmatpush1.msra.mxu0 0.0
  %154 = vmatprep.subr.mxu0 0.0
  %155 = vmatpush1.msra.mxu0 0.0
  %156 = vmatprep.subr.mxu0 0.0
  %157 = vmatpush1.msra.mxu0 0.0
  %158 = vmatprep.subr.mxu0 0.0
  %159 = vmatpush1.msra.mxu0 0.0
  %160 = vmatprep.subr.mxu0 0.0
  %161 = vmatpush1.msra.mxu0 0.0
  %162 = vmatprep.subr.mxu0 0.0
  %163 = vmatpush1.msra.mxu0 0.0
  %164 = vmatprep.subr.mxu0 0.0
  %165 = vmatpush1.msra.mxu0 0.0
  %166 = vmatprep.subr.mxu0 0.0
  %167 = vmatpush1.msra.mxu0 0.0
  %168 = vmatprep.subr.mxu0 0.0
  %169 = vmatpush1.msra.mxu0 0.0
  %170 = vmatprep.mubr.f32.mxu0 0.0
  %171 = vmatmul.mubr.f32.gmra.mrb[0].mxu0 %v17
  %v172 = vpop.f32.mrb[0].mxu0
  %v173 = vadd.f32 %v89, %v172
  %v174 = vpop.f32.mrb[0].mxu0
  %v175 = vadd.f32 %v93, %v174
  %176 = vmatprep.mubr.f32.mxu0 0.0
  %177 = vmatmul.mubr.f32.gmra.mrb[0].mxu0 %v18
  %v178 = vpop.f32.mrb[0].mxu0
  %v179 = vadd.f32 %v89, %v178
  %v180 = vpop.f32.mrb[0].mxu0
  %v181 = vadd.f32 %v93, %v180
  %182 = vmatprep.mubr.f32.mxu0 0.0
  %183 = vmatmul.mubr.f32.gmra.mrb[0].mxu0 %v19
  %v184 = vpop.f32.mrb[0].mxu0
  %v185 = vadd.f32 %v89, %v184
  %v186 = vpop.f32.mrb[0].mxu0
  %v187 = vadd.f32 %v93, %v186
  %188 = vdwg.mxu0
  %189 = vmatprep.subr.mxu0 %v23
  %190 = vmatpush1.msra.mxu0 %v22
  %191 = vmatprep.subr.mxu0 %v27
  %192 = vmatpush1.msra.mxu0 %v26
  %193 = vmatprep.subr.mxu0 %v31
  %194 = vmatpush1.msra.mxu0 %v30
  %195 = vmatprep.subr.mxu0 %v35
  %196 = vmatpush1.msra.mxu0 %v34
  %197 = vmatprep.subr.mxu0 %v39
  %198 = vmatpush1.msra.mxu0 %v38
  %199 = vmatprep.subr.mxu0 %v43
  %200 = vmatpush1.msra.mxu0 %v42
  %201 = vmatprep.subr.mxu0 %v47
  %202 = vmatpush1.msra.mxu0 %v46
  %203 = vmatprep.subr.mxu0 %v51
  %204 = vmatpush1.msra.mxu0 %v50
  %205 = vmatprep.subr.mxu0 %v55
  %206 = vmatpush1.msra.mxu0 %v54
  %207 = vmatprep.subr.mxu0 %v59
  %208 = vmatpush1.msra.mxu0 %v58
  %209 = vmatprep.subr.mxu0 %v63
  %210 = vmatpush1.msra.mxu0 %v62
  %211 = vmatprep.subr.mxu0 %v67
  %212 = vmatpush1.msra.mxu0 %v66
  %213 = vmatprep.subr.mxu0 %v71
  %214 = vmatpush1.msra.mxu0 %v70
  %215 = vmatprep.subr.mxu0 %v75
  %216 = vmatpush1.msra.mxu0 %v74
  %217 = vmatprep.subr.mxu0 %v79
  %218 = vmatpush1.msra.mxu0 %v78
  %219 = vmatprep.subr.mxu0 %v83
  %220 = vmatpush1.msra.mxu0 %v82
  %221 = vmatprep.subr.mxu0 0.0
  %222 = vmatpush1.msra.mxu0 0.0
  %223 = vmatprep.subr.mxu0 0.0
  %224 = vmatpush1.msra.mxu0 0.0
  %225 = vmatprep.subr.mxu0 0.0
  %226 = vmatpush1.msra.mxu0 0.0
  %227 = vmatprep.subr.mxu0 0.0
  %228 = vmatpush1.msra.mxu0 0.0
  %229 = vmatprep.subr.mxu0 0.0
  %230 = vmatpush1.msra.mxu0 0.0
  %231 = vmatprep.subr.mxu0 0.0
  %232 = vmatpush1.msra.mxu0 0.0
  %233 = vmatprep.subr.mxu0 0.0
  %234 = vmatpush1.msra.mxu0 0.0
  %235 = vmatprep.subr.mxu0 0.0
  %236 = vmatpush1.msra.mxu0 0.0
  %237 = vmatprep.subr.mxu0 0.0
  %238 = vmatpush1.msra.mxu0 0.0
  %239 = vmatprep.subr.mxu0 0.0
  %240 = vmatpush1.msra.mxu0 0.0
  %241 = vmatprep.subr.mxu0 0.0
  %242 = vmatpush1.msra.mxu0 0.0
  %243 = vmatprep.subr.mxu0 0.0
  %244 = vmatpush1.msra.mxu0 0.0
  %245 = vmatprep.subr.mxu0 0.0
  %246 = vmatpush1.msra.mxu0 0.0
  %247 = vmatprep.subr.mxu0 0.0
  %248 = vmatpush1.msra.mxu0 0.0
  %249 = vmatprep.subr.mxu0 0.0
  %250 = vmatpush1.msra.mxu0 0.0
  %251 = vmatprep.subr.mxu0 0.0
  %252 = vmatpush1.msra.mxu0 0.0
  %253 = vmatprep.mubr.f32.mxu0 0.0
  %254 = vmatmul.mubr.f32.gmra.mrb[0].mxu0 %v17
  %v255 = vpop.f32.mrb[0].mxu0
  %v256 = vadd.f32 %v97, %v255
  %v257 = vpop.f32.mrb[0].mxu0
  %v258 = vadd.f32 %v101, %v257
  %259 = vmatprep.mubr.f32.mxu0 0.0
  %260 = vmatmul.mubr.f32.gmra.mrb[0].mxu0 %v18
  %v261 = vpop.f32.mrb[0].mxu0
  %v262 = vadd.f32 %v97, %v261
  %v263 = vpop.f32.mrb[0].mxu0
  %v264 = vadd.f32 %v101, %v263
  %265 = vmatprep.mubr.f32.mxu0 0.0
  %266 = vmatmul.mubr.f32.gmra.mrb[0].mxu0 %v19
  %v267 = vpop.f32.mrb[0].mxu0
  %v268 = vadd.f32 %v97, %v267
  %v269 = vpop.f32.mrb[0].mxu0
  %v270 = vadd.f32 %v101, %v269
  %271 = vdwg.mxu0
  %vm272 = vcmp.gt.f32.partialorder %v173, 0.0
  %vm273 = vcmp.gt.f32.partialorder %v175, 0.0
  %vm274 = vcmp.gt.f32.partialorder %v256, 0.0
  %vm275 = vcmp.gt.f32.partialorder %v258, 0.0
  %vm276 = vcmp.gt.f32.partialorder %v179, 0.0
  %vm277 = vcmp.gt.f32.partialorder %v181, 0.0
  %vm278 = vcmp.gt.f32.partialorder %v262, 0.0
  %vm279 = vcmp.gt.f32.partialorder %v264, 0.0
  %vm280 = vcmp.gt.f32.partialorder %v185, 0.0
  %vm281 = vcmp.gt.f32.partialorder %v187, 0.0
  %vm282 = vcmp.gt.f32.partialorder %v268, 0.0
  %vm283 = vcmp.gt.f32.partialorder %v270, 0.0
  %v284 = vmul.f32 %v173, 0.1
  %v285 = vmul.f32 %v175, 0.1
  %v286 = vmul.f32 %v256, 0.1
  %v287 = vmul.f32 %v258, 0.1
  %v288 = vmul.f32 %v179, 0.1
  %v289 = vmul.f32 %v181, 0.1
  %v290 = vmul.f32 %v262, 0.1
  %v291 = vmul.f32 %v264, 0.1
  %v292 = vmul.f32 %v185, 0.1
  %v293 = vmul.f32 %v187, 0.1
  %v294 = vmul.f32 %v268, 0.1
  %v295 = vmul.f32 %v270, 0.1
  %v296 = vsel %vm272, %v173, %v284
  %v297 = vsel %vm273, %v175, %v285
  %v298 = vsel %vm274, %v256, %v286
  %v299 = vsel %vm275, %v258, %v287
  %v300 = vsel %vm276, %v179, %v288
  %v301 = vsel %vm277, %v181, %v289
  %v302 = vsel %vm278, %v262, %v290
  %v303 = vsel %vm279, %v264, %v291
  %v304 = vsel %vm280, %v185, %v292
  %v305 = vsel %vm281, %v187, %v293
  %v306 = vsel %vm282, %v268, %v294
  %v307 = vsel %vm283, %v270, %v295
  %308 = vst [vmem:[%s3] sm:$0xff] %v296
  %309 = vst [vmem:[%s3 + $0x8] sm:$0xff] %v297
  %310 = vst [vmem:[%s3 + $0x10] sm:$0xff] %v300
  %311 = vst [vmem:[%s3 + $0x18] sm:$0xff] %v301
  %312 = vst [vmem:[%s3 + $0x20] sm:$0xff] %v304
  %313 = vst [vmem:[%s3 + $0x28] sm:$0xff] %v305
  %314 = vst [vmem:[%s4] sm:$0xff] %v298
  %315 = vst [vmem:[%s4 + $0x8] sm:$0xff] %v302
  %316 = vst [vmem:[%s4 + $0x10] sm:$0xff] %v306
  %317 = vst [vmem:[%s5] sm:$0xff] %v299
  %318 = vst [vmem:[%s5 + $0x8] sm:$0xff] %v303
  %319 = vst [vmem:[%s5 + $0x10] sm:$0xff] %v307
  // Predicated region
  $region14: #{dep_parser_forward.2} parent=0 // pred_check
    _
  $region15: #{dep_parser_forward.2} parent=0 // pred_check_branch
    %321 = sbr.rel (0) target = $region17
  $region16: #{dep_parser_forward.2} parent=0 // pred_region
    _
  $region17: #{dep_parser_forward.2} parent=0 // pred_fallthru
    _
  // Predicated region
  $region18: #{dep_parser_forward.2} parent=0 // pred_check
    _
  $region19: #{dep_parser_forward.2} parent=0 // pred_check_branch
    %323 = sbr.rel (0) target = $region21
  $region20: #{dep_parser_forward.2} parent=0 // pred_region
    _
  $region21: #{dep_parser_forward.2} parent=0 // pred_fallthru
    _
  // Predicated region
  $region22: #{dep_parser_forward.2} parent=0 // pred_check
    _
  $region23: #{dep_parser_forward.2} parent=0 // pred_check_branch
    %325 = sbr.rel (0) target = $region25
  $region24: #{dep_parser_forward.2} parent=0 // pred_region
    _
  $region25: #{dep_parser_forward.2} parent=0 // pred_fallthru
    _
  // Predicated region
  $region26: #{dep_parser_forward.2} parent=0 // pred_check
    _
  $region27: #{dep_parser_forward.2} parent=0 // pred_check_branch
    %327 = sbr.rel (0) target = $region29
  $region28: #{dep_parser_forward.2} parent=0 // pred_region
    _
  $region29: #{dep_parser_forward.2} parent=0 // pred_fallthru
    _
  // Predicated region
  $region30: #{dep_parser_forward.2} parent=0 // pred_check
    _
  $region31: #{dep_parser_forward.2} parent=0 // pred_check_branch
    %329 = sbr.rel (0) target = $region33
  $region32: #{dep_parser_forward.2} parent=0 // pred_region
    _
  $region33: #{dep_parser_forward.2} parent=0 // pred_fallthru
    _
  // Predicated region
  $region34: #{dep_parser_forward.2} parent=0 // pred_check
    _
  $region35: #{dep_parser_forward.2} parent=0 // pred_check_branch
    %331 = sbr.rel (0) target = $region37
  $region36: #{dep_parser_forward.2} parent=0 // pred_region
    _
  $region37: #{dep_parser_forward.2} parent=0 // pred_fallthru
    _

// kernel: dep_parser_forward.3
$region0: #{dep_parser_forward.3}
  #allocation0 [shape = 'u32[]', space=smem, size = 0x4, offset = 0x4, fixed_abs, tag = 'smem constant byte address 0x4 - core index']
  #allocation1 [shape = 'u32[144,128]{1,0:T(1,128)}', space=vmem, size = 0x12000, scoped, tag = 'internal scratch']
  %s0 = inlined_call_operand.vmem [shape: f32[2,9,256], index: 0, kind: input, shape index: {}]
  %s1 = inlined_call_operand.vmem [shape: f32[2,9,128], index: 1, kind: input, shape index: {}]
  %s2 = inlined_call_operand.vmem [shape: f32[2,9,128], index: 2, kind: input, shape index: {}]
  %s3 = inlined_call_operand.vmem [shape: f32[256,1152], index: 3, kind: input, shape index: {}]
  %s4 = inlined_call_operand.vmem [shape: f32[2,9,9], index: 4, kind: output, shape index: {0}]
  %s5 = inlined_call_operand.vmem [shape: f32[2,9,8], index: 5, kind: output, shape index: {1}]
  %6 = xla_tuple %s4, %s5
  %s7 = sld [smem:[#allocation0]]
  $region57: #{dep_parser_forward.3} parent=0
    _
  %s9 = ssub.s32 1, %s7
  %s10 = scalar_select 0, %s9, %s7
  loop: start=0, step=1, limit=4
  $region2: #{dep_parser_forward.3} parent=0 // loop_pre_header
    _
  $region3: #{dep_parser_forward.3} parent=0 // loop_header
    %s12 = sphi 0, %s16
    %p13 = scmp.ge.s32.totalorder %s12, 4
    %s22 = sphi 0, %s24
    %s25 = sphi 0, %s22
    %s26 = sphi 0, %s25
    %s42 = sphi 0, %s26
    %s48 = sphi 0, %s50
    %s51 = sphi 0, %s48
    %s52 = sphi 0, %s51
    %s68 = sphi 0, %s52
    %s74 = sphi 0, %s76
    %s77 = sphi 0, %s74
    %s78 = sphi 0, %s77
    %s94 = sphi 0, %s78
    %s98 = sphi 0, %s98
    %s100 = sphi 0, %s98
    %s101 = sphi 0, %s100
    %s115 = sphi 0, %s101
    %s121 = sphi 0, %s123
    %s124 = sphi 0, %s121
    %s125 = sphi 0, %s124
    %s141 = sphi 0, %s125
    %s147 = sphi 0, %s149
    %s150 = sphi 0, %s147
    %s151 = sphi 0, %s150
    %s167 = sphi 0, %s151
  $region4: #{dep_parser_forward.3} parent=0 // loop_header_branch
    %15 = sbr.rel (%p13) target = $region8
  $region5: #{dep_parser_forward.3} parent=0 // loop_body
    %s17 = ssub.s32 %s12, 1
    %s18 = ssub.s32 %s12, 2
    %s19 = sadd.s32 %s12, 1
    %s20 = ssub.s32 %s12, %s19
    %p21 = scmp.eq.s32.totalorder %s20, 0
    %s23 = sadd.s32 %s22, 1
    %s24 = scalar_select %p21, %s22, %s23
    %p27 = pneg %p21
    %p28 = scmp.eq.s32.totalorder %s12, 1
    %p29 = por %p27, %p28
    %p30 = scmp.ne.s32.totalorder %s22, %s25
    %p31 = scmp.eq.s32.totalorder %s12, 0
    %p32 = por %p30, %p31
    %p33 = scmp.ne.s32.totalorder %s22, %s25
    %p34 = scmp.eq.s32.totalorder %s17, 1
    %p35 = por %p33, %p34
    %p36 = scmp.ne.s32.totalorder %s25, %s26
    %p37 = scmp.eq.s32.totalorder %s17, 0
    %p38 = por %p36, %p37
    %p39 = scmp.ne.s32.totalorder %s25, %s26
    %p40 = scmp.eq.s32.totalorder %s18, 1
    %p41 = por %p39, %p40
    %p43 = scmp.ne.s32.totalorder %s26, %s42
    %p44 = scmp.eq.s32.totalorder %s18, 0
    %p45 = por %p43, %p44
    %s46 = ssub.s32 %s12, %s19
    %p47 = scmp.eq.s32.totalorder %s46, 0
    %s49 = sadd.s32 %s48, 1
    %s50 = scalar_select %p47, %s48, %s49
    %p53 = pneg %p47
    %p54 = scmp.eq.s32.totalorder %s12, 1
    %p55 = por %p53, %p54
    %p56 = scmp.ne.s32.totalorder %s48, %s51
    %p57 = scmp.eq.s32.totalorder %s12, 0
    %p58 = por %p56, %p57
    %p59 = scmp.ne.s32.totalorder %s48, %s51
    %p60 = scmp.eq.s32.totalorder %s17, 1
    %p61 = por %p59, %p60
    %p62 = scmp.ne.s32.totalorder %s51, %s52
    %p63 = scmp.eq.s32.totalorder %s17, 0
    %p64 = por %p62, %p63
    %p65 = scmp.ne.s32.totalorder %s51, %s52
    %p66 = scmp.eq.s32.totalorder %s18, 1
    %p67 = por %p65, %p66
    %p69 = scmp.ne.s32.totalorder %s52, %s68
    %p70 = scmp.eq.s32.totalorder %s18, 0
    %p71 = por %p69, %p70
    %s72 = ssub.s32 %s12, %s19
    %p73 = scmp.eq.s32.totalorder %s72, 0
    %s75 = sadd.s32 %s74, 1
    %s76 = scalar_select %p73, %s74, %s75
    %p79 = pneg %p73
    %p80 = scmp.eq.s32.totalorder %s12, 1
    %p81 = por %p79, %p80
    %p82 = scmp.ne.s32.totalorder %s74, %s77
    %p83 = scmp.eq.s32.totalorder %s12, 0
    %p84 = por %p82, %p83
    %p85 = scmp.ne.s32.totalorder %s74, %s77
    %p86 = scmp.eq.s32.totalorder %s17, 1
    %p87 = por %p85, %p86
    %p88 = scmp.ne.s32.totalorder %s77, %s78
    %p89 = scmp.eq.s32.totalorder %s17, 0
    %p90 = por %p88, %p89
    %p91 = scmp.ne.s32.totalorder %s77, %s78
    %p92 = scmp.eq.s32.totalorder %s18, 1
    %p93 = por %p91, %p92
    %p95 = scmp.ne.s32.totalorder %s78, %s94
    %p96 = scmp.eq.s32.totalorder %s18, 0
    %p97 = por %p95, %p96
    %s99 = sadd.s32 %s98, 1
    %p102 = scmp.eq.s32.totalorder %s12, 1
    %p103 = scmp.ne.s32.totalorder %s98, %s100
    %p104 = scmp.eq.s32.totalorder %s12, 0
    %p105 = por %p103, %p104
    %p106 = scmp.ne.s32.totalorder %s98, %s100
    %p107 = scmp.eq.s32.totalorder %s17, 1
    %p108 = por %p106, %p107
    %p109 = scmp.ne.s32.totalorder %s100, %s101
    %p110 = scmp.eq.s32.totalorder %s17, 0
    %p111 = por %p109, %p110
    %p112 = scmp.ne.s32.totalorder %s100, %s101
    %p113 = scmp.eq.s32.totalorder %s18, 1
    %p114 = por %p112, %p113
    %p116 = scmp.ne.s32.totalorder %s101, %s115
    %p117 = scmp.eq.s32.totalorder %s18, 0
    %p118 = por %p116, %p117
    %s119 = ssub.s32 %s12, %s19
    %p120 = scmp.eq.s32.totalorder %s119, 0
    %s122 = sadd.s32 %s121, 1
    %s123 = scalar_select %p120, %s121, %s122
    %p126 = pneg %p120
    %p127 = scmp.eq.s32.totalorder %s12, 1
    %p128 = por %p126, %p127
    %p129 = scmp.ne.s32.totalorder %s121, %s124
    %p130 = scmp.eq.s32.totalorder %s12, 0
    %p131 = por %p129, %p130
    %p132 = scmp.ne.s32.totalorder %s121, %s124
    %p133 = scmp.eq.s32.totalorder %s17, 1
    %p134 = por %p132, %p133
    %p135 = scmp.ne.s32.totalorder %s124, %s125
    %p136 = scmp.eq.s32.totalorder %s17, 0
    %p137 = por %p135, %p136
    %p138 = scmp.ne.s32.totalorder %s124, %s125
    %p139 = scmp.eq.s32.totalorder %s18, 1
    %p140 = por %p138, %p139
    %p142 = scmp.ne.s32.totalorder %s125, %s141
    %p143 = scmp.eq.s32.totalorder %s18, 0
    %p144 = por %p142, %p143
    %s145 = ssub.s32 %s12, %s19
    %p146 = scmp.eq.s32.totalorder %s145, 0
    %s148 = sadd.s32 %s147, 1
    %s149 = scalar_select %p146, %s147, %s148
    %p152 = pneg %p146
    %p153 = scmp.eq.s32.totalorder %s12, 1
    %p154 = por %p152, %p153
    %p155 = scmp.ne.s32.totalorder %s147, %s150
    %p156 = scmp.eq.s32.totalorder %s12, 0
    %p157 = por %p155, %p156
    %p158 = scmp.ne.s32.totalorder %s147, %s150
    %p159 = scmp.eq.s32.totalorder %s17, 1
    %p160 = por %p158, %p159
    %p161 = scmp.ne.s32.totalorder %s150, %s151
    %p162 = scmp.eq.s32.totalorder %s17, 0
    %p163 = por %p161, %p162
    %p164 = scmp.ne.s32.totalorder %s150, %s151
    %p165 = scmp.eq.s32.totalorder %s18, 1
    %p166 = por %p164, %p165
    %p168 = scmp.ne.s32.totalorder %s151, %s167
    %p169 = scmp.eq.s32.totalorder %s18, 0
    %p170 = por %p168, %p169
    %p171 = scmp.le.s32.totalorder 1, %s12
    %p172 = scmp.lt.s32.totalorder %s12, 3
    %p173 = pnand %p171, %p172
    %p174 = pneg %p173
    // Predicated region
    $region9: #{dep_parser_forward.3} parent=5 // pred_check
      _
    $region10: #{dep_parser_forward.3} parent=5 // pred_check_branch
      %176 = sbr.rel (%p173) target = $region12
    $region11: #{dep_parser_forward.3} parent=5 // pred_region
      %s177 = ssub.s32 %s12, 1
      // Predicated region
      $region13: #{dep_parser_forward.3} parent=11 // pred_check
        %p178 = pneg %p111
      $region14: #{dep_parser_forward.3} parent=11 // pred_check_branch
        %180 = sbr.rel (%p178) target = $region16
      $region15: #{dep_parser_forward.3} parent=11 // pred_region
        _
      $region16: #{dep_parser_forward.3} parent=11 // pred_fallthru
        _
    $region12: #{dep_parser_forward.3} parent=5 // pred_fallthru
      _
    %p181 = scmp.lt.s32.totalorder %s12, 2
    // Predicated region
    $region17: #{dep_parser_forward.3} parent=5 // pred_check
      %p182 = pneg %p181
    $region18: #{dep_parser_forward.3} parent=5 // pred_check_branch
      %184 = sbr.rel (%p182) target = $region20
    $region19: #{dep_parser_forward.3} parent=5 // pred_region
      // Predicated region
      $region21: #{dep_parser_forward.3} parent=19 // pred_check
        %p185 = pneg %p32
      $region22: #{dep_parser_forward.3} parent=19 // pred_check_branch
        %187 = sbr.rel (%p185) target = $region24
      $region23: #{dep_parser_forward.3} parent=19 // pred_region
        %p188 = scmp.lt.s32.totalorder %s12, 1
        %s189 = scalar_select %p188, %s12, 1
        %s190 = smul.addr %s189, 4
        %s191 = smul.addr %s190, 8
        %s192 = scalar_lea.vmem %s0, %s191
      $region24: #{dep_parser_forward.3} parent=19 // pred_fallthru
        _
      // Predicated region
      $region25: #{dep_parser_forward.3} parent=19 // pred_check
        %p193 = pneg %p58
      $region26: #{dep_parser_forward.3} parent=19 // pred_check_branch
        %195 = sbr.rel (%p193) target = $region28
      $region27: #{dep_parser_forward.3} parent=19 // pred_region
        %p196 = scmp.lt.s32.totalorder %s12, 1
        %s197 = scalar_select %p196, %s12, 1
        %s198 = smul.addr %s197, 2
        %s199 = smul.addr %s198, 8
        %s200 = scalar_lea.vmem %s1, %s199
      $region28: #{dep_parser_forward.3} parent=19 // pred_fallthru
        _
      // Predicated region
      $region29: #{dep_parser_forward.3} parent=19 // pred_check
        %p201 = pneg %p84
      $region30: #{dep_parser_forward.3} parent=19 // pred_check_branch
        %203 = sbr.rel (%p201) target = $region32
      $region31: #{dep_parser_forward.3} parent=19 // pred_region
        %p204 = scmp.lt.s32.totalorder %s12, 1
        %s205 = scalar_select %p204, %s12, 1
        %s206 = smul.addr %s205, 2
        %s207 = smul.addr %s206, 8
        %s208 = scalar_lea.vmem %s2, %s207
      $region32: #{dep_parser_forward.3} parent=19 // pred_fallthru
        _
    $region20: #{dep_parser_forward.3} parent=5 // pred_fallthru
      _
    %p209 = scmp.le.s32.totalorder 1, %s12
    %p210 = scmp.lt.s32.totalorder %s12, 3
    %p211 = pnand %p209, %p210
    %p212 = pneg %p211
    // Predicated region
    $region33: #{dep_parser_forward.3} parent=5 // pred_check
      _
    $region34: #{dep_parser_forward.3} parent=5 // pred_check_branch
      %214 = sbr.rel (%p211) target = $region36
    $region35: #{dep_parser_forward.3} parent=5 // pred_region
      %s215 = ssub.s32 %s12, 1
      %p216 = scmp.lt.s32.totalorder %s17, 1
      %s217 = scalar_select %p216, %s17, 1
      %s218 = smul.addr %s217, 4
      %s219 = smul.addr %s218, 8
      %s220 = scalar_lea.vmem %s0, %s219
      %p221 = pneg %p38
      %p222 = pneg %p35
      %p223 = scmp.lt.s32.totalorder %s17, 1
      %s224 = scalar_select %p223, %s17, 1
      %s225 = smul.addr %s224, 2
      %s226 = smul.addr %s225, 8
      %s227 = scalar_lea.vmem %s1, %s226
      %p228 = pneg %p64
      %p229 = pneg %p61
      %p230 = scmp.lt.s32.totalorder %s17, 1
      %s231 = scalar_select %p230, %s17, 1
      %s232 = smul.addr %s231, 2
      %s233 = smul.addr %s232, 8
      %s234 = scalar_lea.vmem %s2, %s233
      %p235 = pneg %p90
      %p236 = pneg %p87
      %p237 = pneg %p111
      %p238 = pneg %p108
      %p239 = pneg %p137
      %p240 = pneg %p134
      %p241 = scmp.lt.s32.totalorder %s17, 1
      %s242 = scalar_select %p241, %s17, 1
      %s243 = smul.addr %s242, 2
      %s244 = smul.addr %s243, 8
      %s245 = scalar_lea.vmem %s4, %s244
      %p246 = pneg %p163
      %p247 = pneg %p160
      %p248 = scmp.lt.s32.totalorder %s17, 1
      %s249 = scalar_select %p248, %s17, 1
      %s250 = smul.addr %s249, 2
      %s251 = smul.addr %s250, 8
      %s252 = scalar_lea.vmem %s5, %s251
      %p253 = scmp.lt.s32.totalorder %s17, 1
      %s254 = scalar_select %p253, %s17, 1
      %s255 = smul.addr %s254, 4
      %s256 = smul.addr %s255, 8
      %s257 = scalar_lea.vmem %s0, %s256
      %p258 = scmp.lt.s32.totalorder %s17, 1
      %s259 = scalar_select %p258, %s17, 1
      %s260 = smul.addr %s259, 2
      %s261 = smul.addr %s260, 8
      %s262 = scalar_lea.vmem %s1, %s261
      %p263 = scmp.lt.s32.totalorder %s17, 1
      %s264 = scalar_select %p263, %s17, 1
      %s265 = smul.addr %s264, 2
      %s266 = smul.addr %s265, 8
      %s267 = scalar_lea.vmem %s2, %s266
      %p268 = scmp.lt.s32.totalorder %s17, 1
      %s269 = scalar_select %p268, %s17, 1
      %s270 = smul.addr %s269, 2
      %s271 = smul.addr %s270, 8
      %s272 = scalar_lea.vmem %s4, %s271
      %p273 = scmp.lt.s32.totalorder %s17, 1
      %s274 = scalar_select %p273, %s17, 1
      %s275 = smul.addr %s274, 2
      %s276 = smul.addr %s275, 8
      %s277 = scalar_lea.vmem %s5, %s276
      %v278 = vld [vmem:[%s257] sm:$0xff]
      %v279 = vld [vmem:[%s257 + $0x8] sm:$0xff]
      %v280 = vld [vmem:[%s257 + $0x10] sm:$0x1]
      %v281 = vld [vmem:[%s257 + $0x18] sm:$0x1]
      %v282 = vld [vmem:[%s3] sm:$0xff]
      %v283 = vld [vmem:[%s3 + $0x8] sm:$0xff]
      %v284 = vld [vmem:[%s3 + $0x10] sm:$0xff]
      %v285 = vld [vmem:[%s3 + $0x18] sm:$0xff]
      %v286 = vld [vmem:[%s3 + $0x20] sm:$0xff]
      %v287 = vld [vmem:[%s3 + $0x28] sm:$0xff]
      %v288 = vld [vmem:[%s3 + $0x30] sm:$0xff]
      %v289 = vld [vmem:[%s3 + $0x38] sm:$0xff]
      %v290 = vld [vmem:[%s3 + $0x40] sm:$0xff]
      %v291 = vld [vmem:[%s3 + $0x48] sm:$0xff]
      %v292 = vld [vmem:[%s3 + $0x50] sm:$0xff]
      %v293 = vld [vmem:[%s3 + $0x58] sm:$0xff]
      %v294 = vld [vmem:[%s3 + $0x60] sm:$0xff]
      %v295 = vld [vmem:[%s3 + $0x68] sm:$0xff]
      %v296 = vld [vmem:[%s3 + $0x70] sm:$0xff]
      %v297 = vld [vmem:[%s3 + $0x78] sm:$0xff]
      %v298 = vld [vmem:[%s3 + $0x80] sm:$0xff]
      %v299 = vld [vmem:[%s3 + $0x88] sm:$0xff]
      %v300 = vld [vmem:[%s3 + $0x90] sm:$0xff]
      %v301 = vld [vmem:[%s3 + $0x98] sm:$0xff]
      %v302 = vld [vmem:[%s3 + $0xa0] sm:$0xff]
      %v303 = vld [vmem:[%s3 + $0xa8] sm:$0xff]
      %v304 = vld [vmem:[%s3 + $0xb0] sm:$0xff]
      %v305 = vld [vmem:[%s3 + $0xb8] sm:$0xff]
      %v306 = vld [vmem:[%s3 + $0xc0] sm:$0xff]
      %v307 = vld [vmem:[%s3 + $0xc8] sm:$0xff]
      %v308 = vld [vmem:[%s3 + $0xd0] sm:$0xff]
      %v309 = vld [vmem:[%s3 + $0xd8] sm:$0xff]
      %v310 = vld [vmem:[%s3 + $0xe0] sm:$0xff]
      %v311 = vld [vmem:[%s3 + $0xe8] sm:$0xff]
      %v312 = vld [vmem:[%s3 + $0xf0] sm:$0xff]
      %v313 = vld [vmem:[%s3 + $0xf8] sm:$0xff]
      %v314 = vld [vmem:[%s3 + $0x100] sm:$0xff]
      %v315 = vld [vmem:[%s3 + $0x108] sm:$0xff]
      %v316 = vld [vmem:[%s3 + $0x110] sm:$0xff]
      %v317 = vld [vmem:[%s3 + $0x118] sm:$0xff]
      %v318 = vld [vmem:[%s3 + $0x120] sm:$0xff]
      %v319 = vld [vmem:[%s3 + $0x128] sm:$0xff]
      %v320 = vld [vmem:[%s3 + $0x130] sm:$0xff]
      %v321 = vld [vmem:[%s3 + $0x138] sm:$0xff]
      %v322 = vld [vmem:[%s3 + $0x140] sm:$0xff]
      %v323 = vld [vmem:[%s3 + $0x148] sm:$0xff]
      %v324 = vld [vmem:[%s3 + $0x150] sm:$0xff]
      %v325 = vld [vmem:[%s3 + $0x158] sm:$0xff]
      %v326 = vld [vmem:[%s3 + $0x160] sm:$0xff]
      %v327 = vld [vmem:[%s3 + $0x168] sm:$0xff]
      %v328 = vld [vmem:[%s3 + $0x170] sm:$0xff]
      %v329 = vld [vmem:[%s3 + $0x178] sm:$0xff]
      %v330 = vld [vmem:[%s3 + $0x180] sm:$0xff]
      %v331 = vld [vmem:[%s3 + $0x188] sm:$0xff]
      %v332 = vld [vmem:[%s3 + $0x190] sm:$0xff]
      %v333 = vld [vmem:[%s3 + $0x198] sm:$0xff]
      %v334 = vld [vmem:[%s3 + $0x1a0] sm:$0xff]
      %v335 = vld [vmem:[%s3 + $0x1a8] sm:$0xff]
      %v336 = vld [vmem:[%s3 + $0x1b0] sm:$0xff]
      %v337 = vld [vmem:[%s3 + $0x1b8] sm:$0xff]
      %v338 = vld [vmem:[%s3 + $0x1c0] sm:$0xff]
      %v339 = vld [vmem:[%s3 + $0x1c8] sm:$0xff]
      %v340 = vld [vmem:[%s3 + $0x1d0] sm:$0xff]
      %v341 = vld [vmem:[%s3 + $0x1d8] sm:$0xff]
      %v342 = vld [vmem:[%s3 + $0x1e0] sm:$0xff]
      %v343 = vld [vmem:[%s3 + $0x1e8] sm:$0xff]
      %v344 = vld [vmem:[%s3 + $0x1f0] sm:$0xff]
      %v345 = vld [vmem:[%s3 + $0x1f8] sm:$0xff]
      %v346 = vld [vmem:[%s3 + $0x200] sm:$0xff]
      %v347 = vld [vmem:[%s3 + $0x208] sm:$0xff]
      %v348 = vld [vmem:[%s3 + $0x210] sm:$0xff]
      %v349 = vld [vmem:[%s3 + $0x218] sm:$0xff]
      %v350 = vld [vmem:[%s3 + $0x220] sm:$0xff]
      %v351 = vld [vmem:[%s3 + $0x228] sm:$0xff]
      %v352 = vld [vmem:[%s3 + $0x230] sm:$0xff]
      %v353 = vld [vmem:[%s3 + $0x238] sm:$0xff]
      %v354 = vld [vmem:[%s3 + $0x240] sm:$0xff]
      %v355 = vld [vmem:[%s3 + $0x248] sm:$0xff]
      %v356 = vld [vmem:[%s3 + $0x250] sm:$0xff]
      %v357 = vld [vmem:[%s3 + $0x258] sm:$0xff]
      %v358 = vld [vmem:[%s3 + $0x260] sm:$0xff]
      %v359 = vld [vmem:[%s3 + $0x268] sm:$0xff]
      %v360 = vld [vmem:[%s3 + $0x270] sm:$0xff]
      %v361 = vld [vmem:[%s3 + $0x278] sm:$0xff]
      %v362 = vld [vmem:[%s3 + $0x280] sm:$0xff]
      %v363 = vld [vmem:[%s3 + $0x288] sm:$0xff]
      %v364 = vld [vmem:[%s3 + $0x290] sm:$0xff]
      %v365 = vld [vmem:[%s3 + $0x298] sm:$0xff]
      %v366 = vld [vmem:[%s3 + $0x2a0] sm:$0xff]
      %v367 = vld [vmem:[%s3 + $0x2a8] sm:$0xff]
      %v368 = vld [vmem:[%s3 + $0x2b0] sm:$0xff]
      %v369 = vld [vmem:[%s3 + $0x2b8] sm:$0xff]
      %v370 = vld [vmem:[%s3 + $0x2c0] sm:$0xff]
      %v371 = vld [vmem:[%s3 + $0x2c8] sm:$0xff]
      %v372 = vld [vmem:[%s3 + $0x2d0] sm:$0xff]
      %v373 = vld [vmem:[%s3 + $0x2d8] sm:$0xff]
      %v374 = vld [vmem:[%s3 + $0x2e0] sm:$0xff]
      %v375 = vld [vmem:[%s3 + $0x2e8] sm:$0xff]
      %v376 = vld [vmem:[%s3 + $0x2f0] sm:$0xff]
      %v377 = vld [vmem:[%s3 + $0x2f8] sm:$0xff]
      %v378 = vld [vmem:[%s3 + $0x300] sm:$0xff]
      %v379 = vld [vmem:[%s3 + $0x308] sm:$0xff]
      %v380 = vld [vmem:[%s3 + $0x310] sm:$0xff]
      %v381 = vld [vmem:[%s3 + $0x318] sm:$0xff]
      %v382 = vld [vmem:[%s3 + $0x320] sm:$0xff]
      %v383 = vld [vmem:[%s3 + $0x328] sm:$0xff]
      %v384 = vld [vmem:[%s3 + $0x330] sm:$0xff]
      %v385 = vld [vmem:[%s3 + $0x338] sm:$0xff]
      %v386 = vld [vmem:[%s3 + $0x340] sm:$0xff]
      %v387 = vld [vmem:[%s3 + $0x348] sm:$0xff]
      %v388 = vld [vmem:[%s3 + $0x350] sm:$0xff]
      %v389 = vld [vmem:[%s3 + $0x358] sm:$0xff]
      %v390 = vld [vmem:[%s3 + $0x360] sm:$0xff]
      %v391 = vld [vmem:[%s3 + $0x368] sm:$0xff]
      %v392 = vld [vmem:[%s3 + $0x370] sm:$0xff]
      %v393 = vld [vmem:[%s3 + $0x378] sm:$0xff]
      %v394 = vld [vmem:[%s3 + $0x380] sm:$0xff]
      %v395 = vld [vmem:[%s3 + $0x388] sm:$0xff]
      %v396 = vld [vmem:[%s3 + $0x390] sm:$0xff]
      %v397 = vld [vmem:[%s3 + $0x398] sm:$0xff]
      %v398 = vld [vmem:[%s3 + $0x3a0] sm:$0xff]
      %v399 = vld [vmem:[%s3 + $0x3a8] sm:$0xff]
      %v400 = vld [vmem:[%s3 + $0x3b0] sm:$0xff]
      %v401 = vld [vmem:[%s3 + $0x3b8] sm:$0xff]
      %v402 = vld [vmem:[%s3 + $0x3c0] sm:$0xff]
      %v403 = vld [vmem:[%s3 + $0x3c8] sm:$0xff]
      %v404 = vld [vmem:[%s3 + $0x3d0] sm:$0xff]
      %v405 = vld [vmem:[%s3 + $0x3d8] sm:$0xff]
      %v406 = vld [vmem:[%s3 + $0x3e0] sm:$0xff]
      %v407 = vld [vmem:[%s3 + $0x3e8] sm:$0xff]
      %v408 = vld [vmem:[%s3 + $0x3f0] sm:$0xff]
      %v409 = vld [vmem:[%s3 + $0x3f8] sm:$0xff]
      %v410 = vld [vmem:[%s3 + $0x400] sm:$0xff]
      %v411 = vld [vmem:[%s3 + $0x408] sm:$0xff]
      %v412 = vld [vmem:[%s3 + $0x410] sm:$0xff]
      %v413 = vld [vmem:[%s3 + $0x418] sm:$0xff]
      %v414 = vld [vmem:[%s3 + $0x420] sm:$0xff]
      %v415 = vld [vmem:[%s3 + $0x428] sm:$0xff]
      %v416 = vld [vmem:[%s3 + $0x430] sm:$0xff]
      %v417 = vld [vmem:[%s3 + $0x438] sm:$0xff]
      %v418 = vld [vmem:[%s3 + $0x440] sm:$0xff]
      %v419 = vld [vmem:[%s3 + $0x448] sm:$0xff]
      %v420 = vld [vmem:[%s3 + $0x450] sm:$0xff]
      %v421 = vld [vmem:[%s3 + $0x458] sm:$0xff]
      %v422 = vld [vmem:[%s3 + $0x460] sm:$0xff]
      %v423 = vld [vmem:[%s3 + $0x468] sm:$0xff]
      %v424 = vld [vmem:[%s3 + $0x470] sm:$0xff]
      %v425 = vld [vmem:[%s3 + $0x478] sm:$0xff]
      %v426 = vld [vmem:[%s3 + $0x480] sm:$0xff]
      %v427 = vld [vmem:[%s3 + $0x488] sm:$0xff]
      %v428 = vld [vmem:[%s3 + $0x490] sm:$0xff]
      %v429 = vld [vmem:[%s3 + $0x498] sm:$0xff]
      %v430 = vld [vmem:[%s3 + $0x4a0] sm:$0xff]
      %v431 = vld [vmem:[%s3 + $0x4a8] sm:$0xff]
      %v432 = vld [vmem:[%s3 + $0x4b0] sm:$0xff]
      %v433 = vld [vmem:[%s3 + $0x4b8] sm:$0xff]
      %v434 = vld [vmem:[%s3 + $0x4c0] sm:$0xff]
      %v435 = vld [vmem:[%s3 + $0x4c8] sm:$0xff]
      %v436 = vld [vmem:[%s3 + $0x4d0] sm:$0xff]
      %v437 = vld [vmem:[%s3 + $0x4d8] sm:$0xff]
      %v438 = vld [vmem:[%s3 + $0x4e0] sm:$0xff]
      %v439 = vld [vmem:[%s3 + $0x4e8] sm:$0xff]
      %v440 = vld [vmem:[%s3 + $0x4f0] sm:$0xff]
      %v441 = vld [vmem:[%s3 + $0x4f8] sm:$0xff]
      %v442 = vld [vmem:[%s3 + $0x500] sm:$0xff]
      %v443 = vld [vmem:[%s3 + $0x508] sm:$0xff]
      %v444 = vld [vmem:[%s3 + $0x510] sm:$0xff]
      %v445 = vld [vmem:[%s3 + $0x518] sm:$0xff]
      %v446 = vld [vmem:[%s3 + $0x520] sm:$0xff]
      %v447 = vld [vmem:[%s3 + $0x528] sm:$0xff]
      %v448 = vld [vmem:[%s3 + $0x530] sm:$0xff]
      %v449 = vld [vmem:[%s3 + $0x538] sm:$0xff]
      %v450 = vld [vmem:[%s3 + $0x540] sm:$0xff]
      %v451 = vld [vmem:[%s3 + $0x548] sm:$0xff]
      %v452 = vld [vmem:[%s3 + $0x550] sm:$0xff]
      %v453 = vld [vmem:[%s3 + $0x558] sm:$0xff]
      %v454 = vld [vmem:[%s3 + $0x560] sm:$0xff]
      %v455 = vld [vmem:[%s3 + $0x568] sm:$0xff]
      %v456 = vld [vmem:[%s3 + $0x570] sm:$0xff]
      %v457 = vld [vmem:[%s3 + $0x578] sm:$0xff]
      %v458 = vld [vmem:[%s3 + $0x580] sm:$0xff]
      %v459 = vld [vmem:[%s3 + $0x588] sm:$0xff]
      %v460 = vld [vmem:[%s3 + $0x590] sm:$0xff]
      %v461 = vld [vmem:[%s3 + $0x598] sm:$0xff]
      %v462 = vld [vmem:[%s3 + $0x5a0] sm:$0xff]
      %v463 = vld [vmem:[%s3 + $0x5a8] sm:$0xff]
      %v464 = vld [vmem:[%s3 + $0x5b0] sm:$0xff]
      %v465 = vld [vmem:[%s3 + $0x5b8] sm:$0xff]
      %v466 = vld [vmem:[%s3 + $0x5c0] sm:$0xff]
      %v467 = vld [vmem:[%s3 + $0x5c8] sm:$0xff]
      %v468 = vld [vmem:[%s3 + $0x5d0] sm:$0xff]
      %v469 = vld [vmem:[%s3 + $0x5d8] sm:$0xff]
      %v470 = vld [vmem:[%s3 + $0x5e0] sm:$0xff]
      %v471 = vld [vmem:[%s3 + $0x5e8] sm:$0xff]
      %v472 = vld [vmem:[%s3 + $0x5f0] sm:$0xff]
      %v473 = vld [vmem:[%s3 + $0x5f8] sm:$0xff]
      %v474 = vld [vmem:[%s3 + $0x600] sm:$0xff]
      %v475 = vld [vmem:[%s3 + $0x608] sm:$0xff]
      %v476 = vld [vmem:[%s3 + $0x610] sm:$0xff]
      %v477 = vld [vmem:[%s3 + $0x618] sm:$0xff]
      %v478 = vld [vmem:[%s3 + $0x620] sm:$0xff]
      %v479 = vld [vmem:[%s3 + $0x628] sm:$0xff]
      %v480 = vld [vmem:[%s3 + $0x630] sm:$0xff]
      %v481 = vld [vmem:[%s3 + $0x638] sm:$0xff]
      %v482 = vld [vmem:[%s3 + $0x640] sm:$0xff]
      %v483 = vld [vmem:[%s3 + $0x648] sm:$0xff]
      %v484 = vld [vmem:[%s3 + $0x650] sm:$0xff]
      %v485 = vld [vmem:[%s3 + $0x658] sm:$0xff]
      %v486 = vld [vmem:[%s3 + $0x660] sm:$0xff]
      %v487 = vld [vmem:[%s3 + $0x668] sm:$0xff]
      %v488 = vld [vmem:[%s3 + $0x670] sm:$0xff]
      %v489 = vld [vmem:[%s3 + $0x678] sm:$0xff]
      %v490 = vld [vmem:[%s3 + $0x680] sm:$0xff]
      %v491 = vld [vmem:[%s3 + $0x688] sm:$0xff]
      %v492 = vld [vmem:[%s3 + $0x690] sm:$0xff]
      %v493 = vld [vmem:[%s3 + $0x698] sm:$0xff]
      %v494 = vld [vmem:[%s3 + $0x6a0] sm:$0xff]
      %v495 = vld [vmem:[%s3 + $0x6a8] sm:$0xff]
      %v496 = vld [vmem:[%s3 + $0x6b0] sm:$0xff]
      %v497 = vld [vmem:[%s3 + $0x6b8] sm:$0xff]
      %v498 = vld [vmem:[%s3 + $0x6c0] sm:$0xff]
      %v499 = vld [vmem:[%s3 + $0x6c8] sm:$0xff]
      %v500 = vld [vmem:[%s3 + $0x6d0] sm:$0xff]
      %v501 = vld [vmem:[%s3 + $0x6d8] sm:$0xff]
      %v502 = vld [vmem:[%s3 + $0x6e0] sm:$0xff]
      %v503 = vld [vmem:[%s3 + $0x6e8] sm:$0xff]
      %v504 = vld [vmem:[%s3 + $0x6f0] sm:$0xff]
      %v505 = vld [vmem:[%s3 + $0x6f8] sm:$0xff]
      %v506 = vld [vmem:[%s3 + $0x700] sm:$0xff]
      %v507 = vld [vmem:[%s3 + $0x708] sm:$0xff]
      %v508 = vld [vmem:[%s3 + $0x710] sm:$0xff]
      %v509 = vld [vmem:[%s3 + $0x718] sm:$0xff]
      %v510 = vld [vmem:[%s3 + $0x720] sm:$0xff]
      %v511 = vld [vmem:[%s3 + $0x728] sm:$0xff]
      %v512 = vld [vmem:[%s3 + $0x730] sm:$0xff]
      %v513 = vld [vmem:[%s3 + $0x738] sm:$0xff]
      %v514 = vld [vmem:[%s3 + $0x740] sm:$0xff]
      %v515 = vld [vmem:[%s3 + $0x748] sm:$0xff]
      %v516 = vld [vmem:[%s3 + $0x750] sm:$0xff]
      %v517 = vld [vmem:[%s3 + $0x758] sm:$0xff]
      %v518 = vld [vmem:[%s3 + $0x760] sm:$0xff]
      %v519 = vld [vmem:[%s3 + $0x768] sm:$0xff]
      %v520 = vld [vmem:[%s3 + $0x770] sm:$0xff]
      %v521 = vld [vmem:[%s3 + $0x778] sm:$0xff]
      %v522 = vld [vmem:[%s3 + $0x780] sm:$0xff]
      %v523 = vld [vmem:[%s3 + $0x788] sm:$0xff]
      %v524 = vld [vmem:[%s3 + $0x790] sm:$0xff]
      %v525 = vld [vmem:[%s3 + $0x798] sm:$0xff]
      %v526 = vld [vmem:[%s3 + $0x7a0] sm:$0xff]
      %v527 = vld [vmem:[%s3 + $0x7a8] sm:$0xff]
      %v528 = vld [vmem:[%s3 + $0x7b0] sm:$0xff]
      %v529 = vld [vmem:[%s3 + $0x7b8] sm:$0xff]
      %v530 = vld [vmem:[%s3 + $0x7c0] sm:$0xff]
      %v531 = vld [vmem:[%s3 + $0x7c8] sm:$0xff]
      %v532 = vld [vmem:[%s3 + $0x7d0] sm:$0xff]
      %v533 = vld [vmem:[%s3 + $0x7d8] sm:$0xff]
      %v534 = vld [vmem:[%s3 + $0x7e0] sm:$0xff]
      %v535 = vld [vmem:[%s3 + $0x7e8] sm:$0xff]
      %v536 = vld [vmem:[%s3 + $0x7f0] sm:$0xff]
      %v537 = vld [vmem:[%s3 + $0x7f8] sm:$0xff]
      %v538 = vld [vmem:[%s3 + $0x800] sm:$0xff]
      %v539 = vld [vmem:[%s3 + $0x808] sm:$0xff]
      %v540 = vld [vmem:[%s3 + $0x810] sm:$0xff]
      %v541 = vld [vmem:[%s3 + $0x818] sm:$0xff]
      %v542 = vld [vmem:[%s3 + $0x820] sm:$0xff]
      %v543 = vld [vmem:[%s3 + $0x828] sm:$0xff]
      %v544 = vld [vmem:[%s3 + $0x830] sm:$0xff]
      %v545 = vld [vmem:[%s3 + $0x838] sm:$0xff]
      %v546 = vld [vmem:[%s3 + $0x840] sm:$0xff]
      %v547 = vld [vmem:[%s3 + $0x848] sm:$0xff]
      %v548 = vld [vmem:[%s3 + $0x850] sm:$0xff]
      %v549 = vld [vmem:[%s3 + $0x858] sm:$0xff]
      %v550 = vld [vmem:[%s3 + $0x860] sm:$0xff]
      %v551 = vld [vmem:[%s3 + $0x868] sm:$0xff]
      %v552 = vld [vmem:[%s3 + $0x870] sm:$0xff]
      %v553 = vld [vmem:[%s3 + $0x878] sm:$0xff]
      %v554 = vld [vmem:[%s3 + $0x880] sm:$0xff]
      %v555 = vld [vmem:[%s3 + $0x888] sm:$0xff]
      %v556 = vld [vmem:[%s3 + $0x890] sm:$0xff]
      %v557 = vld [vmem:[%s3 + $0x898] sm:$0xff]
      %v558 = vld [vmem:[%s3 + $0x8a0] sm:$0xff]
      %v559 = vld [vmem:[%s3 + $0x8a8] sm:$0xff]
      %v560 = vld [vmem:[%s3 + $0x8b0] sm:$0xff]
      %v561 = vld [vmem:[%s3 + $0x8b8] sm:$0xff]
      %v562 = vld [vmem:[%s3 + $0x8c0] sm:$0xff]
      %v563 = vld [vmem:[%s3 + $0x8c8] sm:$0xff]
      %v564 = vld [vmem:[%s3 + $0x8d0] sm:$0xff]
      %v565 = vld [vmem:[%s3 + $0x8d8] sm:$0xff]
      %v566 = vld [vmem:[%s3 + $0x8e0] sm:$0xff]
      %v567 = vld [vmem:[%s3 + $0x8e8] sm:$0xff]
      %v568 = vld [vmem:[%s3 + $0x8f0] sm:$0xff]
      %v569 = vld [vmem:[%s3 + $0x8f8] sm:$0xff]
      %570 = vmatprep.subr.mxu0 %v283
      %571 = vmatpush1.msra.mxu0 %v282
      %572 = vmatprep.subr.mxu0 %v292
      %573 = vmatpush1.msra.mxu0 %v291
      %574 = vmatprep.subr.mxu0 %v301
      %575 = vmatpush1.msra.mxu0 %v300
      %576 = vmatprep.subr.mxu0 %v310
      %577 = vmatpush1.msra.mxu0 %v309
      %578 = vmatprep.subr.mxu0 %v319
      %579 = vmatpush1.msra.mxu0 %v318
      %580 = vmatprep.subr.mxu0 %v328
      %581 = vmatpush1.msra.mxu0 %v327
      %582 = vmatprep.subr.mxu0 %v337
      %583 = vmatpush1.msra.mxu0 %v336
      %584 = vmatprep.subr.mxu0 %v346
      %585 = vmatpush1.msra.mxu0 %v345
      %586 = vmatprep.subr.mxu0 %v355
      %587 = vmatpush1.msra.mxu0 %v354
      %588 = vmatprep.subr.mxu0 %v364
      %589 = vmatpush1.msra.mxu0 %v363
      %590 = vmatprep.subr.mxu0 %v373
      %591 = vmatpush1.msra.mxu0 %v372
      %592 = vmatprep.subr.mxu0 %v382
      %593 = vmatpush1.msra.mxu0 %v381
      %594 = vmatprep.subr.mxu0 %v391
      %595 = vmatpush1.msra.mxu0 %v390
      %596 = vmatprep.subr.mxu0 %v400
      %597 = vmatpush1.msra.mxu0 %v399
      %598 = vmatprep.subr.mxu0 %v409
      %599 = vmatpush1.msra.mxu0 %v408
      %600 = vmatprep.subr.mxu0 %v418
      %601 = vmatpush1.msra.mxu0 %v417
      %602 = vmatprep.subr.mxu0 %v427
      %603 = vmatpush1.msra.mxu0 %v426
      %604 = vmatprep.subr.mxu0 %v436
      %605 = vmatpush1.msra.mxu0 %v435
      %606 = vmatprep.subr.mxu0 %v445
      %607 = vmatpush1.msra.mxu0 %v444
      %608 = vmatprep.subr.mxu0 %v454
      %609 = vmatpush1.msra.mxu0 %v453
      %610 = vmatprep.subr.mxu0 %v463
      %611 = vmatpush1.msra.mxu0 %v462
      %612 = vmatprep.subr.mxu0 %v472
      %613 = vmatpush1.msra.mxu0 %v471
      %614 = vmatprep.subr.mxu0 %v481
      %615 = vmatpush1.msra.mxu0 %v480
      %616 = vmatprep.subr.mxu0 %v490
      %617 = vmatpush1.msra.mxu0 %v489
      %618 = vmatprep.subr.mxu0 %v499
      %619 = vmatpush1.msra.mxu0 %v498
      %620 = vmatprep.subr.mxu0 %v508
      %621 = vmatpush1.msra.mxu0 %v507
      %622 = vmatprep.subr.mxu0 %v517
      %623 = vmatpush1.msra.mxu0 %v516
      %624 = vmatprep.subr.mxu0 %v526
      %625 = vmatpush1.msra.mxu0 %v525
      %626 = vmatprep.subr.mxu0 %v535
      %627 = vmatpush1.msra.mxu0 %v534
      %628 = vmatprep.subr.mxu0 %v544
      %629 = vmatpush1.msra.mxu0 %v543
      %630 = vmatprep.subr.mxu0 %v553
      %631 = vmatpush1.msra.mxu0 %v552
      %632 = vmatprep.subr.mxu0 %v562
      %633 = vmatpush1.msra.mxu0 %v561
      %634 = vmatprep.mubr.f32.mxu0 %v279
      %635 = vmatmul.mubr.f32.gmra.mrb[0].mxu0 %v278
      %v636 = vpop.f32.mrb[0].mxu0
      %v637 = vadd.f32 0.0, %v636
      %v638 = vpop.f32.mrb[0].mxu0
      %v639 = vadd.f32 0.0, %v638
      %640 = vmatprep.mubr.f32.mxu0 %v281
      %641 = vmatmul.mubr.f32.gmra.mrb[0].mxu0 %v280
      %v642 = vpop.f32.mrb[0].mxu0
      %v643 = vadd.f32 0.0, %v642
      %v644 = vpop.f32.mrb[0].mxu0
      %v645 = vadd.f32 0.0, %v644
      %646 = vdwg.mxu0
      %647 = vmatprep.subr.mxu0 %v285
      %648 = vmatpush1.msra.mxu0 %v284
      %649 = vmatprep.subr.mxu0 %v294
      %650 = vmatpush1.msra.mxu0 %v293
      %651 = vmatprep.subr.mxu0 %v303
      %652 = vmatpush1.msra.mxu0 %v302
      %653 = vmatprep.subr.mxu0 %v312
      %654 = vmatpush1.msra.mxu0 %v311
      %655 = vmatprep.subr.mxu0 %v321
      %656 = vmatpush1.msra.mxu0 %v320
      %657 = vmatprep.subr.mxu0 %v330
      %658 = vmatpush1.msra.mxu0 %v329
      %659 = vmatprep.subr.mxu0 %v339
      %660 = vmatpush1.msra.mxu0 %v338
      %661 = vmatprep.subr.mxu0 %v348
      %662 = vmatpush1.msra.mxu0 %v347
      %663 = vmatprep.subr.mxu0 %v357
      %664 = vmatpush1.msra.mxu0 %v356
      %665 = vmatprep.subr.mxu0 %v366
      %666 = vmatpush1.msra.mxu0 %v365
      %667 = vmatprep.subr.mxu0 %v375
      %668 = vmatpush1.msra.mxu0 %v374
      %669 = vmatprep.subr.mxu0 %v384
      %670 = vmatpush1.msra.mxu0 %v383
      %671 = vmatprep.subr.mxu0 %v393
      %672 = vmatpush1.msra.mxu0 %v392
      %673 = vmatprep.subr.mxu0 %v402
      %674 = vmatpush1.msra.mxu0 %v401
      %675 = vmatprep.subr.mxu0 %v411
      %676 = vmatpush1.msra.mxu0 %v410
      %677 = vmatprep.subr.mxu0 %v420
      %678 = vmatpush1.msra.mxu0 %v419
      %679 = vmatprep.subr.mxu0 %v429
      %680 = vmatpush1.msra.mxu0 %v428
      %681 = vmatprep.subr.mxu0 %v438
      %682 = vmatpush1.msra.mxu0 %v437
      %683 = vmatprep.subr.mxu0 %v447
      %684 = vmatpush1.msra.mxu0 %v446
      %685 = vmatprep.subr.mxu0 %v456
      %686 = vmatpush1.msra.mxu0 %v455
      %687 = vmatprep.subr.mxu0 %v465
      %688 = vmatpush1.msra.mxu0 %v464
      %689 = vmatprep.subr.mxu0 %v474
      %690 = vmatpush1.msra.mxu0 %v473
      %691 = vmatprep.subr.mxu0 %v483
      %692 = vmatpush1.msra.mxu0 %v482
      %693 = vmatprep.subr.mxu0 %v492
      %694 = vmatpush1.msra.mxu0 %v491
      %695 = vmatprep.subr.mxu0 %v501
      %696 = vmatpush1.msra.mxu0 %v500
      %697 = vmatprep.subr.mxu0 %v510
      %698 = vmatpush1.msra.mxu0 %v509
      %699 = vmatprep.subr.mxu0 %v519
      %700 = vmatpush1.msra.mxu0 %v518
      %701 = vmatprep.subr.mxu0 %v528
      %702 = vmatpush1.msra.mxu0 %v527
      %703 = vmatprep.subr.mxu0 %v537
      %704 = vmatpush1.msra.mxu0 %v536
      %705 = vmatprep.subr.mxu0 %v546
      %706 = vmatpush1.msra.mxu0 %v545
      %707 = vmatprep.subr.mxu0 %v555
      %708 = vmatpush1.msra.mxu0 %v554
      %709 = vmatprep.subr.mxu0 %v564
      %710 = vmatpush1.msra.mxu0 %v563
      %711 = vmatprep.mubr.f32.mxu0 %v279
      %712 = vmatmul.mubr.f32.gmra.mrb[0].mxu0 %v278
      %v713 = vpop.f32.mrb[0].mxu0
      %v714 = vadd.f32 0.0, %v713
      %v715 = vpop.f32.mrb[0].mxu0
      %v716 = vadd.f32 0.0, %v715
      %717 = vmatprep.mubr.f32.mxu0 %v281
      %718 = vmatmul.mubr.f32.gmra.mrb[0].mxu0 %v280
      %v719 = vpop.f32.mrb[0].mxu0
      %v720 = vadd.f32 0.0, %v719
      %v721 = vpop.f32.mrb[0].mxu0
      %v722 = vadd.f32 0.0, %v721
      %723 = vdwg.mxu0
      %724 = vmatprep.subr.mxu0 %v287
      %725 = vmatpush1.msra.mxu0 %v286
      %726 = vmatprep.subr.mxu0 %v296
      %727 = vmatpush1.msra.mxu0 %v295
      %728 = vmatprep.subr.mxu0 %v305
      %729 = vmatpush1.msra.mxu0 %v304
      %730 = vmatprep.subr.mxu0 %v314
      %731 = vmatpush1.msra.mxu0 %v313
      %732 = vmatprep.subr.mxu0 %v323
      %733 = vmatpush1.msra.mxu0 %v322
      %734 = vmatprep.subr.mxu0 %v332
      %735 = vmatpush1.msra.mxu0 %v331
      %736 = vmatprep.subr.mxu0 %v341
      %737 = vmatpush1.msra.mxu0 %v340
      %738 = vmatprep.subr.mxu0 %v350
      %739 = vmatpush1.msra.mxu0 %v349
      %740 = vmatprep.subr.mxu0 %v359
      %741 = vmatpush1.msra.mxu0 %v358
      %742 = vmatprep.subr.mxu0 %v368
      %743 = vmatpush1.msra.mxu0 %v367
      %744 = vmatprep.subr.mxu0 %v377
      %745 = vmatpush1.msra.mxu0 %v376
      %746 = vmatprep.subr.mxu0 %v386
      %747 = vmatpush1.msra.mxu0 %v385
      %748 = vmatprep.subr.mxu0 %v395
      %749 = vmatpush1.msra.mxu0 %v394
      %750 = vmatprep.subr.mxu0 %v404
      %751 = vmatpush1.msra.mxu0 %v403
      %752 = vmatprep.subr.mxu0 %v413
      %753 = vmatpush1.msra.mxu0 %v412
      %754 = vmatprep.subr.mxu0 %v422
      %755 = vmatpush1.msra.mxu0 %v421
      %756 = vmatprep.subr.mxu0 %v431
      %757 = vmatpush1.msra.mxu0 %v430
      %758 = vmatprep.subr.mxu0 %v440
      %759 = vmatpush1.msra.mxu0 %v439
      %760 = vmatprep.subr.mxu0 %v449
      %761 = vmatpush1.msra.mxu0 %v448
      %762 = vmatprep.subr.mxu0 %v458
      %763 = vmatpush1.msra.mxu0 %v457
      %764 = vmatprep.subr.mxu0 %v467
      %765 = vmatpush1.msra.mxu0 %v466
      %766 = vmatprep.subr.mxu0 %v476
      %767 = vmatpush1.msra.mxu0 %v475
      %768 = vmatprep.subr.mxu0 %v485
      %769 = vmatpush1.msra.mxu0 %v484
      %770 = vmatprep.subr.mxu0 %v494
      %771 = vmatpush1.msra.mxu0 %v493
      %772 = vmatprep.subr.mxu0 %v503
      %773 = vmatpush1.msra.mxu0 %v502
      %774 = vmatprep.subr.mxu0 %v512
      %775 = vmatpush1.msra.mxu0 %v511
      %776 = vmatprep.subr.mxu0 %v521
      %777 = vmatpush1.msra.mxu0 %v520
      %778 = vmatprep.subr.mxu0 %v530
      %779 = vmatpush1.msra.mxu0 %v529
      %780 = vmatprep.subr.mxu0 %v539
      %781 = vmatpush1.msra.mxu0 %v538
      %782 = vmatprep.subr.mxu0 %v548
      %783 = vmatpush1.msra.mxu0 %v547
      %784 = vmatprep.subr.mxu0 %v557
      %785 = vmatpush1.msra.mxu0 %v556
      %786 = vmatprep.subr.mxu0 %v566
      %787 = vmatpush1.msra.mxu0 %v565
      %788 = vmatprep.mubr.f32.mxu0 %v279
      %789 = vmatmul.mubr.f32.gmra.mrb[0].mxu0 %v278
      %v790 = vpop.f32.mrb[0].mxu0
      %v791 = vadd.f32 0.0, %v790
      %v792 = vpop.f32.mrb[0].mxu0
      %v793 = vadd.f32 0.0, %v792
      %794 = vmatprep.mubr.f32.mxu0 %v281
      %795 = vmatmul.mubr.f32.gmra.mrb[0].mxu0 %v280
      %v796 = vpop.f32.mrb[0].mxu0
      %v797 = vadd.f32 0.0, %v796
      %v798 = vpop.f32.mrb[0].mxu0
      %v799 = vadd.f32 0.0, %v798
      %800 = vdwg.mxu0
      %801 = vmatprep.subr.mxu0 %v289
      %802 = vmatpush1.msra.mxu0 %v288
      %803 = vmatprep.subr.mxu0 %v298
      %804 = vmatpush1.msra.mxu0 %v297
      %805 = vmatprep.subr.mxu0 %v307
      %806 = vmatpush1.msra.mxu0 %v306
      %807 = vmatprep.subr.mxu0 %v316
      %808 = vmatpush1.msra.mxu0 %v315
      %809 = vmatprep.subr.mxu0 %v325
      %810 = vmatpush1.msra.mxu0 %v324
      %811 = vmatprep.subr.mxu0 %v334
      %812 = vmatpush1.msra.mxu0 %v333
      %813 = vmatprep.subr.mxu0 %v343
      %814 = vmatpush1.msra.mxu0 %v342
      %815 = vmatprep.subr.mxu0 %v352
      %816 = vmatpush1.msra.mxu0 %v351
      %817 = vmatprep.subr.mxu0 %v361
      %818 = vmatpush1.msra.mxu0 %v360
      %819 = vmatprep.subr.mxu0 %v370
      %820 = vmatpush1.msra.mxu0 %v369
      %821 = vmatprep.subr.mxu0 %v379
      %822 = vmatpush1.msra.mxu0 %v378
      %823 = vmatprep.subr.mxu0 %v388
      %824 = vmatpush1.msra.mxu0 %v387
      %825 = vmatprep.subr.mxu0 %v397
      %826 = vmatpush1.msra.mxu0 %v396
      %827 = vmatprep.subr.mxu0 %v406
      %828 = vmatpush1.msra.mxu0 %v405
      %829 = vmatprep.subr.mxu0 %v415
      %830 = vmatpush1.msra.mxu0 %v414
      %831 = vmatprep.subr.mxu0 %v424
      %832 = vmatpush1.msra.mxu0 %v423
      %833 = vmatprep.subr.mxu0 %v433
      %834 = vmatpush1.msra.mxu0 %v432
      %835 = vmatprep.subr.mxu0 %v442
      %836 = vmatpush1.msra.mxu0 %v441
      %837 = vmatprep.subr.mxu0 %v451
      %838 = vmatpush1.msra.mxu0 %v450
      %839 = vmatprep.subr.mxu0 %v460
      %840 = vmatpush1.msra.mxu0 %v459
      %841 = vmatprep.subr.mxu0 %v469
      %842 = vmatpush1.msra.mxu0 %v468
      %843 = vmatprep.subr.mxu0 %v478
      %844 = vmatpush1.msra.mxu0 %v477
      %845 = vmatprep.subr.mxu0 %v487
      %846 = vmatpush1.msra.mxu0 %v486
      %847 = vmatprep.subr.mxu0 %v496
      %848 = vmatpush1.msra.mxu0 %v495
      %849 = vmatprep.subr.mxu0 %v505
      %850 = vmatpush1.msra.mxu0 %v504
      %851 = vmatprep.subr.mxu0 %v514
      %852 = vmatpush1.msra.mxu0 %v513
      %853 = vmatprep.subr.mxu0 %v523
      %854 = vmatpush1.msra.mxu0 %v522
      %855 = vmatprep.subr.mxu0 %v532
      %856 = vmatpush1.msra.mxu0 %v531
      %857 = vmatprep.subr.mxu0 %v541
      %858 = vmatpush1.msra.mxu0 %v540
      %859 = vmatprep.subr.mxu0 %v550
      %860 = vmatpush1.msra.mxu0 %v549
      %861 = vmatprep.subr.mxu0 %v559
      %862 = vmatpush1.msra.mxu0 %v558
      %863 = vmatprep.subr.mxu0 %v568
      %864 = vmatpush1.msra.mxu0 %v567
      %865 = vmatprep.mubr.f32.mxu0 %v279
      %866 = vmatmul.mubr.f32.gmra.mrb[0].mxu0 %v278
      %v867 = vpop.f32.mrb[0].mxu0
      %v868 = vadd.f32 0.0, %v867
      %v869 = vpop.f32.mrb[0].mxu0
      %v870 = vadd.f32 0.0, %v869
      %871 = vmatprep.mubr.f32.mxu0 %v281
      %872 = vmatmul.mubr.f32.gmra.mrb[0].mxu0 %v280
      %v873 = vpop.f32.mrb[0].mxu0
      %v874 = vadd.f32 0.0, %v873
      %v875 = vpop.f32.mrb[0].mxu0
      %v876 = vadd.f32 0.0, %v875
      %877 = vdwg.mxu0
      %878 = vmatprep.subr.mxu0 0.0
      %879 = vmatpush1.msra.mxu0 %v290
      %880 = vmatprep.subr.mxu0 0.0
      %881 = vmatpush1.msra.mxu0 %v299
      %882 = vmatprep.subr.mxu0 0.0
      %883 = vmatpush1.msra.mxu0 %v308
      %884 = vmatprep.subr.mxu0 0.0
      %885 = vmatpush1.msra.mxu0 %v317
      %886 = vmatprep.subr.mxu0 0.0
      %887 = vmatpush1.msra.mxu0 %v326
      %888 = vmatprep.subr.mxu0 0.0
      %889 = vmatpush1.msra.mxu0 %v335
      %890 = vmatprep.subr.mxu0 0.0
      %891 = vmatpush1.msra.mxu0 %v344
      %892 = vmatprep.subr.mxu0 0.0
      %893 = vmatpush1.msra.mxu0 %v353
      %894 = vmatprep.subr.mxu0 0.0
      %895 = vmatpush1.msra.mxu0 %v362
      %896 = vmatprep.subr.mxu0 0.0
      %897 = vmatpush1.msra.mxu0 %v371
      %898 = vmatprep.subr.mxu0 0.0
      %899 = vmatpush1.msra.mxu0 %v380
      %900 = vmatprep.subr.mxu0 0.0
      %901 = vmatpush1.msra.mxu0 %v389
      %902 = vmatprep.subr.mxu0 0.0
      %903 = vmatpush1.msra.mxu0 %v398
      %904 = vmatprep.subr.mxu0 0.0
      %905 = vmatpush1.msra.mxu0 %v407
      %906 = vmatprep.subr.mxu0 0.0
      %907 = vmatpush1.msra.mxu0 %v416
      %908 = vmatprep.subr.mxu0 0.0
      %909 = vmatpush1.msra.mxu0 %v425
      %910 = vmatprep.subr.mxu0 0.0
      %911 = vmatpush1.msra.mxu0 %v434
      %912 = vmatprep.subr.mxu0 0.0
      %913 = vmatpush1.msra.mxu0 %v443
      %914 = vmatprep.subr.mxu0 0.0
      %915 = vmatpush1.msra.mxu0 %v452
      %916 = vmatprep.subr.mxu0 0.0
      %917 = vmatpush1.msra.mxu0 %v461
      %918 = vmatprep.subr.mxu0 0.0
      %919 = vmatpush1.msra.mxu0 %v470
      %920 = vmatprep.subr.mxu0 0.0
      %921 = vmatpush1.msra.mxu0 %v479
      %922 = vmatprep.subr.mxu0 0.0
      %923 = vmatpush1.msra.mxu0 %v488
      %924 = vmatprep.subr.mxu0 0.0
      %925 = vmatpush1.msra.mxu0 %v497
      %926 = vmatprep.subr.mxu0 0.0
      %927 = vmatpush1.msra.mxu0 %v506
      %928 = vmatprep.subr.mxu0 0.0
      %929 = vmatpush1.msra.mxu0 %v515
      %930 = vmatprep.subr.mxu0 0.0
      %931 = vmatpush1.msra.mxu0 %v524
      %932 = vmatprep.subr.mxu0 0.0
      %933 = vmatpush1.msra.mxu0 %v533
      %934 = vmatprep.subr.mxu0 0.0
      %935 = vmatpush1.msra.mxu0 %v542
      %936 = vmatprep.subr.mxu0 0.0
      %937 = vmatpush1.msra.mxu0 %v551
      %938 = vmatprep.subr.mxu0 0.0
      %939 = vmatpush1.msra.mxu0 %v560
      %940 = vmatprep.subr.mxu0 0.0
      %941 = vmatpush1.msra.mxu0 %v569
      %942 = vmatprep.mubr.f32.mxu0 %v279
      %943 = vmatmul.mubr.f32.gmra.mrb[0].mxu0 %v278
      %v944 = vpop.f32.mrb[0].mxu0
      %v945 = vadd.f32 0.0, %v944
      %v946 = vpop.f32.mrb[0].mxu0
      %947 = vmatprep.mubr.f32.mxu0 %v281
      %948 = vmatmul.mubr.f32.gmra.mrb[0].mxu0 %v280
      %v949 = vpop.f32.mrb[0].mxu0
      %v950 = vadd.f32 0.0, %v949
      %v951 = vpop.f32.mrb[0].mxu0
      %952 = vdwg.mxu0
      %v953 = vld [vmem:[%s262] sm:$0xff]
      %v954 = vld [vmem:[%s262 + $0x8] sm:$0x1]
      %955 = vmatprep.subr.mxu0 0.0
      %956 = vmatpush1.xpose.msra.mxu0 %v953
      %957 = vmatprep.subr.mxu0 0.0
      %958 = vmatpush1.xpose.msra.mxu0 %v954
      %959 = vmatprep.subr.mxu0 0.0
      %960 = vmatpush1.xpose.msra.mxu0 0.0
      %961 = vmatprep.subr.mxu0 0.0
      %962 = vmatpush1.xpose.msra.mxu0 0.0
      %963 = vmatprep.subr.mxu0 0.0
      %964 = vmatpush1.xpose.msra.mxu0 0.0
      %965 = vmatprep.subr.mxu0 0.0
      %966 = vmatpush1.xpose.msra.mxu0 0.0
      %967 = vmatprep.subr.mxu0 0.0
      %968 = vmatpush1.xpose.msra.mxu0 0.0
      %969 = vmatprep.subr.mxu0 0.0
      %970 = vmatpush1.xpose.msra.mxu0 0.0
      %971 = vmatprep.subr.mxu0 0.0
      %972 = vmatpush1.xpose.msra.mxu0 0.0
      %973 = vmatprep.subr.mxu0 0.0
      %974 = vmatpush1.xpose.msra.mxu0 0.0
      %975 = vmatprep.subr.mxu0 0.0
      %976 = vmatpush1.xpose.msra.mxu0 0.0
      %977 = vmatprep.subr.mxu0 0.0
      %978 = vmatpush1.xpose.msra.mxu0 0.0
      %979 = vmatprep.subr.mxu0 0.0
      %980 = vmatpush1.xpose.msra.mxu0 0.0
      %981 = vmatprep.subr.mxu0 0.0
      %982 = vmatpush1.xpose.msra.mxu0 0.0
      %983 = vmatprep.subr.mxu0 0.0
      %984 = vmatpush1.xpose.msra.mxu0 0.0
      %985 = vmatprep.subr.mxu0 0.0
      %986 = vmatpush1.xpose.msra.mxu0 0.0
      %987 = vmatprep.subr.mxu0 0.0
      %988 = vmatpush1.xpose.msra.mxu0 0.0
      %989 = vmatprep.subr.mxu0 0.0
      %990 = vmatpush1.xpose.msra.mxu0 0.0
      %991 = vmatprep.subr.mxu0 0.0
      %992 = vmatpush1.xpose.msra.mxu0 0.0
      %993 = vmatprep.subr.mxu0 0.0
      %994 = vmatpush1.xpose.msra.mxu0 0.0
      %995 = vmatprep.subr.mxu0 0.0
      %996 = vmatpush1.xpose.msra.mxu0 0.0
      %997 = vmatprep.subr.mxu0 0.0
      %998 = vmatpush1.xpose.msra.mxu0 0.0
      %999 = vmatprep.subr.mxu0 0.0
      %1000 = vmatpush1.xpose.msra.mxu0 0.0
      %1001 = vmatprep.subr.mxu0 0.0
      %1002 = vmatpush1.xpose.msra.mxu0 0.0
      %1003 = vmatprep.subr.mxu0 0.0
      %1004 = vmatpush1.xpose.msra.mxu0 0.0
      %1005 = vmatprep.subr.mxu0 0.0
      %1006 = vmatpush1.xpose.msra.mxu0 0.0
      %1007 = vmatprep.subr.mxu0 0.0
      %1008 = vmatpush1.xpose.msra.mxu0 0.0
      %1009 = vmatprep.subr.mxu0 0.0
      %1010 = vmatpush1.xpose.msra.mxu0 0.0
      %1011 = vmatprep.subr.mxu0 0.0
      %1012 = vmatpush1.xpose.msra.mxu0 0.0
      %1013 = vmatprep.subr.mxu0 0.0
      %1014 = vmatpush1.xpose.msra.mxu0 0.0
      %1015 = vmatprep.subr.mxu0 0.0
      %1016 = vmatpush1.xpose.msra.mxu0 0.0
      %1017 = vmatprep.subr.mxu0 0.0
      %1018 = vmatpush1.xpose.msra.mxu0 0.0
      %1019 = vmatprep.mubr.f32.mxu0 0.0
      %1020 = vmatmul.mubr.f32.gmra.mrb[0].mxu0 %v637
      %v1021 = vpop.f32.mrb[0].mxu0
      %v1022 = vadd.f32 0.0, %v1021
      %v1023 = vpop.f32.mrb[0].mxu0
      %1024 = vmatprep.mubr.f32.mxu0 0.0
      %1025 = vmatmul.mubr.f32.gmra.mrb[0].mxu0 %v643
      %v1026 = vpop.f32.mrb[0].mxu0
      %v1027 = vadd.f32 0.0, %v1026
      %v1028 = vpop.f32.mrb[0].mxu0
      %1029 = vdwg.mxu0
      %vm1030 = vcmask 72704
      %1031 = vst.msk [vmem:[%s272] sm:$0xff] %vm1030, %v1022
      %vm1032 = vcmask 65536
      %1033 = vst.msk [vmem:[%s272 + $0x8] sm:$0x1] %vm1032, %v1027
      %v1034 = vld [vmem:[%s267] sm:$0xff]
      %v1035 = vld [vmem:[%s267 + $0x8] sm:$0x1]
      %v1036 = vmul.f32 %v639, %v1034
      %v1037 = vmul.f32 %v645, %v1035
      %1038 = vadd.xlane.f32.xlu0 %v1036
      %v1039 = vpop.xlane.xlu0 %1038
      %vm1040 = vcmask 1040384
      %v1041 = vsel %vm1040, %v1037, 0.0
      %1042 = vadd.xlane.f32.xlu0 %v1041
      %v1043 = vpop.xlane.xlu0 %1042
      %v1044 = vmul.f32 %v714, %v1034
      %v1045 = vmul.f32 %v720, %v1035
      %1046 = vadd.xlane.f32.xlu0 %v1044
      %v1047 = vpop.xlane.xlu0 %1046
      %v1048 = vsel %vm1040, %v1045, 0.0
      %1049 = vadd.xlane.f32.xlu0 %v1048
      %v1050 = vpop.xlane.xlu0 %1049
      %v1051 = vmul.f32 %v716, %v1034
      %v1052 = vmul.f32 %v722, %v1035
      %1053 = vadd.xlane.f32.xlu0 %v1051
      %v1054 = vpop.xlane.xlu0 %1053
      %v1055 = vsel %vm1040, %v1052, 0.0
      %1056 = vadd.xlane.f32.xlu0 %v1055
      %v1057 = vpop.xlane.xlu0 %1056
      %v1058 = vmul.f32 %v791, %v1034
      %v1059 = vmul.f32 %v797, %v1035
      %1060 = vadd.xlane.f32.xlu0 %v1058
      %v1061 = vpop.xlane.xlu0 %1060
      %v1062 = vsel %vm1040, %v1059, 0.0
      %1063 = vadd.xlane.f32.xlu0 %v1062
      %v1064 = vpop.xlane.xlu0 %1063
      %v1065 = vmul.f32 %v793, %v1034
      %v1066 = vmul.f32 %v799, %v1035
      %1067 = vadd.xlane.f32.xlu0 %v1065
      %v1068 = vpop.xlane.xlu0 %1067
      %v1069 = vsel %vm1040, %v1066, 0.0
      %1070 = vadd.xlane.f32.xlu0 %v1069
      %v1071 = vpop.xlane.xlu0 %1070
      %v1072 = vmul.f32 %v868, %v1034
      %v1073 = vmul.f32 %v874, %v1035
      %1074 = vadd.xlane.f32.xlu0 %v1072
      %v1075 = vpop.xlane.xlu0 %1074
      %v1076 = vsel %vm1040, %v1073, 0.0
      %1077 = vadd.xlane.f32.xlu0 %v1076
      %v1078 = vpop.xlane.xlu0 %1077
      %v1079 = vmul.f32 %v870, %v1034
      %v1080 = vmul.f32 %v876, %v1035
      %1081 = vadd.xlane.f32.xlu0 %v1079
      %v1082 = vpop.xlane.xlu0 %1081
      %v1083 = vsel %vm1040, %v1080, 0.0
      %1084 = vadd.xlane.f32.xlu0 %v1083
      %v1085 = vpop.xlane.xlu0 %1084
      %v1086 = vmul.f32 %v945, %v1034
      %v1087 = vmul.f32 %v950, %v1035
      %1088 = vadd.xlane.f32.xlu0 %v1086
      %v1089 = vpop.xlane.xlu0 %1088
      %v1090 = vsel %vm1040, %v1087, 0.0
      %1091 = vadd.xlane.f32.xlu0 %v1090
      %v1092 = vpop.xlane.xlu0 %1091
      %vm1093 = vcmask 7168
      %v1094 = vsel %vm1093, %v1039, %v1047
      %v1095 = vsel %vm1093, %v1043, %v1050
      %vm1096 = vcmask 15360
      %v1097 = vsel %vm1096, %v1094, %v1054
      %v1098 = vsel %vm1096, %v1095, %v1057
      %vm1099 = vcmask 23552
      %v1100 = vsel %vm1099, %v1097, %v1061
      %v1101 = vsel %vm1099, %v1098, %v1064
      %vm1102 = vcmask 31744
      %v1103 = vsel %vm1102, %v1100, %v1068
      %v1104 = vsel %vm1102, %v1101, %v1071
      %vm1105 = vcmask 39936
      %v1106 = vsel %vm1105, %v1103, %v1075
      %v1107 = vsel %vm1105, %v1104, %v1078
      %vm1108 = vcmask 48128
      %v1109 = vsel %vm1108, %v1106, %v1082
      %v1110 = vsel %vm1108, %v1107, %v1085
      %vm1111 = vcmask 56320
      %v1112 = vsel %vm1111, %v1109, %v1089
      %v1113 = vsel %vm1111, %v1110, %v1092
      %vm1114 = vcmask 64512
      %1115 = vst.msk [vmem:[%s277] sm:$0xff] %vm1114, %v1112
      %vm1116 = vcmask 57344
      %1117 = vst.msk [vmem:[%s277 + $0x8] sm:$0x1] %vm1116, %v1113
      %p1118 = scmp.lt.s32.totalorder %s17, 1
      %s1119 = scalar_select %p1118, %s17, 1
      %s1120 = smul.addr %s1119, 2
      %s1121 = smul.addr %s1120, 8
      %s1122 = scalar_lea.vmem %s4, %s1121
      %p1123 = scmp.lt.s32.totalorder %s17, 1
      %s1124 = scalar_select %p1123, %s17, 1
      %s1125 = smul.addr %s1124, 2
      %s1126 = smul.addr %s1125, 8
      %s1127 = scalar_lea.vmem %s5, %s1126
      // Predicated region
      $region37: #{dep_parser_forward.3} parent=35 // pred_check
        %p1128 = pneg %p134
      $region38: #{dep_parser_forward.3} parent=35 // pred_check_branch
        %1130 = sbr.rel (%p1128) target = $region40
      $region39: #{dep_parser_forward.3} parent=35 // pred_region
        _
      $region40: #{dep_parser_forward.3} parent=35 // pred_fallthru
        _
      // Predicated region
      $region41: #{dep_parser_forward.3} parent=35 // pred_check
        %p1131 = pneg %p160
      $region42: #{dep_parser_forward.3} parent=35 // pred_check_branch
        %1133 = sbr.rel (%p1131) target = $region44
      $region43: #{dep_parser_forward.3} parent=35 // pred_region
        _
      $region44: #{dep_parser_forward.3} parent=35 // pred_fallthru
        _
    $region36: #{dep_parser_forward.3} parent=5 // pred_fallthru
      _
    %p1134 = scmp.le.s32.totalorder 2, %s12
    // Predicated region
    $region45: #{dep_parser_forward.3} parent=5 // pred_check
      %p1135 = pneg %p1134
    $region46: #{dep_parser_forward.3} parent=5 // pred_check_branch
      %1137 = sbr.rel (%p1135) target = $region48
    $region47: #{dep_parser_forward.3} parent=5 // pred_region
      %s1138 = ssub.s32 %s12, 2
      // Predicated region
      $region49: #{dep_parser_forward.3} parent=47 // pred_check
        %p1139 = pneg %p140
      $region50: #{dep_parser_forward.3} parent=47 // pred_check_branch
        %1141 = sbr.rel (%p1139) target = $region52
      $region51: #{dep_parser_forward.3} parent=47 // pred_region
        %p1142 = scmp.lt.s32.totalorder %s18, 1
        %s1143 = scalar_select %p1142, %s18, 1
        %s1144 = smul.addr %s1143, 2
        %s1145 = smul.addr %s1144, 8
        %s1146 = scalar_lea.vmem %s4, %s1145
      $region52: #{dep_parser_forward.3} parent=47 // pred_fallthru
        _
      // Predicated region
      $region53: #{dep_parser_forward.3} parent=47 // pred_check
        %p1147 = pneg %p166
      $region54: #{dep_parser_forward.3} parent=47 // pred_check_branch
        %1149 = sbr.rel (%p1147) target = $region56
      $region55: #{dep_parser_forward.3} parent=47 // pred_region
        %p1150 = scmp.lt.s32.totalorder %s18, 1
        %s1151 = scalar_select %p1150, %s18, 1
        %s1152 = smul.addr %s1151, 2
        %s1153 = smul.addr %s1152, 8
        %s1154 = scalar_lea.vmem %s5, %s1153
      $region56: #{dep_parser_forward.3} parent=47 // pred_fallthru
        _
    $region48: #{dep_parser_forward.3} parent=5 // pred_fallthru
      _
  $region6: #{dep_parser_forward.3} parent=0 // loop_footer
    %s16 = sadd.s32 1, %s12
  $region7: #{dep_parser_forward.3} parent=0 // loop_footer_branch
    %11 = sbr.rel target = $region3
  $region8: #{dep_parser_forward.3} parent=0 // loop_exit
    _

</llo_original>
